<compile_context>
chip_gen: v5e
topology: v5e:2x2
jax: 0.10.0
libtpu: 0.0.40
codegen_flags: <defaults>
</compile_context>

<pallas_src>
import math

import jax
import jax.numpy as jnp
from jax.experimental import pallas as pl
from jax.experimental.pallas import tpu as pltpu

# ---------------- model config (small, consistent with the module) ----------------
B, S = 2, 8          # batch, sequence length
D_MODEL = 32         # d_model
NUM_HEADS = 4        # num_heads
D_FF = 64            # d_ff (must be <= 3*D_MODEL for the packed-vector layout)
LN_EPS = 1e-5

assert D_MODEL % NUM_HEADS == 0
assert D_FF <= 3 * D_MODEL


def encoder_layer_kernel(x_ref, wqkv_ref, wo_ref, w1_ref, w2_ref, vecs_ref, o_ref):
    """One grid step == one batch element: a (S, D) activation block."""
    s_len, d = x_ref.shape
    d_ff = w1_ref.shape[1]
    h = NUM_HEADS
    d_k = d // h
    scale = 1.0 / math.sqrt(d_k)

    x = x_ref[...]                       # (S, D) float32
    vecs = vecs_ref[...]                 # (8, 3D): packed biases / LN params
    b_qkv = vecs[0:1, :]                 # (1, 3D)
    b_ff1 = vecs[1:2, :d_ff]             # (1, D_FF)
    b_o   = vecs[2:3, :d]                # (1, D)
    b_ff2 = vecs[3:4, :d]
    g1    = vecs[4:5, :d]
    beta1 = vecs[5:6, :d]
    g2    = vecs[6:7, :d]
    beta2 = vecs[7:8, :d]

    # ---- fused Q/K/V projection: one MXU pass, N = 3*D lanes ----
    qkv = jnp.dot(x, wqkv_ref[...], preferred_element_type=jnp.float32) + b_qkv  # (S, 3D)
    q = qkv[:, 0 * d:1 * d].reshape(s_len, h, d_k)
    k = qkv[:, 1 * d:2 * d].reshape(s_len, h, d_k)
    v = qkv[:, 2 * d:3 * d].reshape(s_len, h, d_k)

    # ---- all heads at once: batched einsums + single softmax ----
    scores = jnp.einsum("qhd,khd->hqk", q, k,
                        preferred_element_type=jnp.float32) * scale            # (H,S,S)
    scores = scores - jnp.max(scores, axis=-1, keepdims=True)                  # stable
    p = jnp.exp(scores)
    p = p / jnp.sum(p, axis=-1, keepdims=True)                                 # exact softmax
    ctx = jnp.einsum("hqk,khd->qhd", p, v,
                     preferred_element_type=jnp.float32)                       # (S,H,d_k)

    # combine heads (contiguous reshape) + single W_o matmul
    attn = jnp.dot(ctx.reshape(s_len, d), wo_ref[...],
                   preferred_element_type=jnp.float32) + b_o                   # (S, D)

    # ---- residual + LayerNorm 1 (rsqrt -> EUP; reuse centered tensor) ----
    h1 = x + attn
    mu1 = jnp.mean(h1, axis=-1, keepdims=True)
    c1 = h1 - mu1
    var1 = jnp.mean(c1 * c1, axis=-1, keepdims=True)
    hn = c1 * jax.lax.rsqrt(var1 + LN_EPS) * g1 + beta1

    # ---- feed-forward: Linear -> ReLU -> Linear ----
    f = jnp.dot(hn, w1_ref[...], preferred_element_type=jnp.float32) + b_ff1
    f = jnp.maximum(f, 0.0)
    f = jnp.dot(f, w2_ref[...], preferred_element_type=jnp.float32) + b_ff2

    # ---- residual + LayerNorm 2 ----
    h2 = hn + f
    mu2 = jnp.mean(h2, axis=-1, keepdims=True)
    c2 = h2 - mu2
    var2 = jnp.mean(c2 * c2, axis=-1, keepdims=True)
    out = c2 * jax.lax.rsqrt(var2 + LN_EPS) * g2 + beta2

    o_ref[...] = out.astype(o_ref.dtype)        # single (S, D) store


def encoder_layer(x, kp):
    """x: (B, S, D) float32. kp: packed kernel params (see pack_params)."""
    bx, sx, dx = x.shape
    n = bx * sx
    d_k = dx // NUM_HEADS
    x2 = x.reshape(n, dx)                       # wrapper-side flatten (free in XLA)

    args = (x2, kp["wqkv"], kp["wo"], kp["w1"], kp["w2"], kp["vecs"])

    flops = (6 * n * dx * dx                         # fused QKV projection
             + bx * NUM_HEADS * 4 * sx * sx * d_k    # scores + P@V
             + 2 * n * dx * dx                       # W_o
             + 4 * n * dx * D_FF)                    # FFN (two matmuls)
    transcendentals = bx * NUM_HEADS * sx * sx + 3 * n    # exp + rsqrt/divide
    bytes_accessed = sum(int(a.size) * 4 for a in args) + n * dx * 4

    def whole(shape):
        # full-array (weight) block, revisited every grid step -> no re-DMA
        return pl.BlockSpec(shape, lambda b: (0, 0))

    out2 = pl.pallas_call(
        encoder_layer_kernel,
        out_shape=jax.ShapeDtypeStruct((n, dx), x.dtype),
        grid=(bx,),
        in_specs=[
            pl.BlockSpec((sx, dx), lambda b: (b, 0)),     # activations: one batch / step
            whole(kp["wqkv"].shape),
            whole(kp["wo"].shape),
            whole(kp["w1"].shape),
            whole(kp["w2"].shape),
            whole(kp["vecs"].shape),
        ],
        out_specs=pl.BlockSpec((sx, dx), lambda b: (b, 0)),
        compiler_params=pltpu.CompilerParams(
            dimension_semantics=("parallel",)),           # shards across v7x's 2 TCs
        cost_estimate=pl.CostEstimate(flops=flops,
                                      transcendentals=transcendentals,
                                      bytes_accessed=bytes_accessed),
    )(*args)
    return out2.reshape(bx, sx, dx)


def make_params(key):
    """Deterministic synthetic parameters, pre-transposed to (in, out)."""
    ks = jax.random.split(key, 12)

    def lin(kw, kb, fan_in, fan_out):
        w = jax.random.normal(kw, (fan_in, fan_out), jnp.float32) * 0.08
        b = jax.random.normal(kb, (1, fan_out), jnp.float32) * 0.02
        return w, b

    wq, bq = lin(ks[0], ks[1], D_MODEL, D_MODEL)
    wk, bk = lin(ks[2], ks[3], D_MODEL, D_MODEL)
    wv, bv = lin(ks[4], ks[5], D_MODEL, D_MODEL)
    wo, bo = lin(ks[6], ks[7], D_MODEL, D_MODEL)
    w1, b1 = lin(ks[8], ks[9], D_MODEL, D_FF)
    w2, b2 = lin(ks[10], ks[11], D_FF, D_MODEL)
    return dict(
        wq=wq, bq=bq, wk=wk, bk=bk, wv=wv, bv=bv, wo=wo, bo=bo,
        w1=w1, b1=b1, w2=w2, b2=b2,
        g1=jnp.ones((1, D_MODEL), jnp.float32), beta1=jnp.zeros((1, D_MODEL), jnp.float32),
        g2=jnp.ones((1, D_MODEL), jnp.float32), beta2=jnp.zeros((1, D_MODEL), jnp.float32),
    )


def pack_params(p):
    """Fuse QKV weights and consolidate all 1-D vectors into one (8, 3D) block."""
    wqkv = jnp.concatenate([p["wq"], p["wk"], p["wv"]], axis=1)       # (D, 3D)
    vecs = jnp.zeros((8, 3 * D_MODEL), jnp.float32)
    vecs = vecs.at[0, :].set(jnp.concatenate([p["bq"], p["bk"], p["bv"]], axis=1)[0])
    vecs = vecs.at[1, :D_FF].set(p["b1"][0])
    vecs = vecs.at[2, :D_MODEL].set(p["bo"][0])
    vecs = vecs.at[3, :D_MODEL].set(p["b2"][0])
    vecs = vecs.at[4, :D_MODEL].set(p["g1"][0])
    vecs = vecs.at[5, :D_MODEL].set(p["beta1"][0])
    vecs = vecs.at[6, :D_MODEL].set(p["g2"][0])
    vecs = vecs.at[7, :D_MODEL].set(p["beta2"][0])
    return dict(wqkv=wqkv, wo=p["wo"], w1=p["w1"], w2=p["w2"], vecs=vecs)


def encoder_layer_ref(x, p):
    """Pure-JAX reference mirroring the PyTorch forward (eval-mode dropout)."""
    bx, sx, dx = x.shape
    d_k = dx // NUM_HEADS
    q = x @ p["wq"] + p["bq"]
    k = x @ p["wk"] + p["bk"]
    v = x @ p["wv"] + p["bv"]

    def split(t):  # (B,S,D) -> (B,H,S,d_k)
        return t.reshape(bx, sx, NUM_HEADS, d_k).transpose(0, 2, 1, 3)

    qh, kh, vh = split(q), split(k), split(v)
    scores = jnp.einsum("bhqd,bhkd->bhqk", qh, kh) / math.sqrt(d_k)
    attn = jax.nn.softmax(scores, axis=-1) @ vh
    attn = attn.transpose(0, 2, 1, 3).reshape(bx, sx, dx)
    attn = attn @ p["wo"] + p["bo"]

    def ln(t, g, b):
        mu = jnp.mean(t, -1, keepdims=True)
        var = jnp.mean((t - mu) ** 2, -1, keepdims=True)
        return (t - mu) / jnp.sqrt(var + LN_EPS) * g + b

    hn = ln(x + attn, p["g1"], p["beta1"])
    f = jnp.maximum(hn @ p["w1"] + p["b1"], 0.0) @ p["w2"] + p["b2"]
    return ln(hn + f, p["g2"], p["beta2"])


if __name__ == "__main__":
    key = jax.random.PRNGKey(0)
    kx, kp_key = jax.random.split(key)
    x = jax.random.normal(kx, (B, S, D_MODEL), jnp.float32)
    params = make_params(kp_key)
    kparams = pack_params(params)

    out = encoder_layer(x, kparams)
    out = jax.block_until_ready(out)

    ref = encoder_layer_ref(x, params)
    assert out.shape == (B, S, D_MODEL)
    # Softmax now uses an exact divide; tolerance kept conservative only to absorb
    # MXU f32 multi-pass vs XLA contraction-order differences.
    assert jnp.allclose(out, ref, rtol=5e-3, atol=5e-3), "mismatch vs reference"
    print("KERNEL_OK")
</pallas_src>

<mosaic_0001>
module attributes {stable_mosaic.version = 11 : i64} {
  func.func @encoder_layer_kernel(%arg0: i32, %arg1: memref<8x32xf32, #tpu.memory_space<vmem>>, %arg2: memref<32x96xf32, #tpu.memory_space<vmem>>, %arg3: memref<32x32xf32, #tpu.memory_space<vmem>>, %arg4: memref<32x64xf32, #tpu.memory_space<vmem>>, %arg5: memref<64x32xf32, #tpu.memory_space<vmem>>, %arg6: memref<8x96xf32, #tpu.memory_space<vmem>>, %arg7: memref<8x32xf32, #tpu.memory_space<vmem>>) attributes {dimension_semantics = [#tpu.dimension_semantics<parallel>], iteration_bounds = array<i64: 2>, scalar_prefetch = 0 : i64, scratch_operands = 0 : i64, tpu.core_type = #tpu.core_type<tc>, window_params = [{transform_indices = @transform_0, window_bounds = array<i64: 8, 32>}, {pipeline_mode = #tpu.pipeline_mode<synchronous>, transform_indices = @transform_1, window_bounds = array<i64: 32, 96>}, {pipeline_mode = #tpu.pipeline_mode<synchronous>, transform_indices = @transform_2, window_bounds = array<i64: 32, 32>}, {pipeline_mode = #tpu.pipeline_mode<synchronous>, transform_indices = @transform_3, window_bounds = array<i64: 32, 64>}, {pipeline_mode = #tpu.pipeline_mode<synchronous>, transform_indices = @transform_4, window_bounds = array<i64: 64, 32>}, {pipeline_mode = #tpu.pipeline_mode<synchronous>, transform_indices = @transform_5, window_bounds = array<i64: 8, 96>}, {transform_indices = @transform_6, window_bounds = array<i64: 8, 32>}]} {
    %c0 = arith.constant 0 : index
    %c0_0 = arith.constant 0 : index
    %0 = vector.load %arg1[%c0, %c0_0] : memref<8x32xf32, #tpu.memory_space<vmem>>, vector<8x32xf32>
    %c0_1 = arith.constant 0 : index
    %c0_2 = arith.constant 0 : index
    %1 = vector.load %arg6[%c0_1, %c0_2] : memref<8x96xf32, #tpu.memory_space<vmem>>, vector<8x96xf32>
    %2 = vector.extract_strided_slice %1 {offsets = [0, 0], sizes = [1, 96], strides = [1, 1]} : vector<8x96xf32> to vector<1x96xf32>
    %3 = vector.extract_strided_slice %1 {offsets = [1, 0], sizes = [1, 64], strides = [1, 1]} : vector<8x96xf32> to vector<1x64xf32>
    %4 = vector.extract_strided_slice %1 {offsets = [2, 0], sizes = [1, 32], strides = [1, 1]} : vector<8x96xf32> to vector<1x32xf32>
    %5 = vector.extract_strided_slice %1 {offsets = [3, 0], sizes = [1, 32], strides = [1, 1]} : vector<8x96xf32> to vector<1x32xf32>
    %6 = vector.extract_strided_slice %1 {offsets = [4, 0], sizes = [1, 32], strides = [1, 1]} : vector<8x96xf32> to vector<1x32xf32>
    %7 = vector.extract_strided_slice %1 {offsets = [5, 0], sizes = [1, 32], strides = [1, 1]} : vector<8x96xf32> to vector<1x32xf32>
    %8 = vector.extract_strided_slice %1 {offsets = [6, 0], sizes = [1, 32], strides = [1, 1]} : vector<8x96xf32> to vector<1x32xf32>
    %9 = vector.extract_strided_slice %1 {offsets = [7, 0], sizes = [1, 32], strides = [1, 1]} : vector<8x96xf32> to vector<1x32xf32>
    %c0_3 = arith.constant 0 : index
    %c0_4 = arith.constant 0 : index
    %10 = vector.load %arg2[%c0_3, %c0_4] : memref<32x96xf32, #tpu.memory_space<vmem>>, vector<32x96xf32>
    %cst = arith.constant dense<0.000000e+00> : vector<8x96xf32>
    %11 = tpu.matmul %0, %10, %cst {dimension_numbers = #tpu.dot_dimension_numbers<[1], [0], [0], [1], [0, 0, 1, 1], [], []>} : vector<8x32xf32>, vector<32x96xf32>, vector<8x96xf32> -> vector<8x96xf32>
    %12 = vector.broadcast %2 : vector<1x96xf32> to vector<8x96xf32>
    %13 = arith.addf %11, %12 : vector<8x96xf32>
    %14 = vector.extract_strided_slice %13 {offsets = [0, 0], sizes = [8, 32], strides = [1, 1]} : vector<8x96xf32> to vector<8x32xf32>
    %15 = vector.shape_cast %14 : vector<8x32xf32> to vector<8x4x8xf32>
    %16 = vector.extract_strided_slice %13 {offsets = [0, 32], sizes = [8, 32], strides = [1, 1]} : vector<8x96xf32> to vector<8x32xf32>
    %17 = vector.shape_cast %16 : vector<8x32xf32> to vector<8x4x8xf32>
    %18 = vector.extract_strided_slice %13 {offsets = [0, 64], sizes = [8, 32], strides = [1, 1]} : vector<8x96xf32> to vector<8x32xf32>
    %19 = vector.shape_cast %18 : vector<8x32xf32> to vector<8x4x8xf32>
    "tpu.trace_start"() <{level = 10 : i32, message = "qhd,khd->hqk"}> : () -> ()
    %cst_5 = arith.constant dense<0.000000e+00> : vector<4x8x8xf32>
    %20 = tpu.matmul %15, %17, %cst_5 {dimension_numbers = #tpu.dot_dimension_numbers<[2], [2], [0], [0], [0, 1, 0, 0, 1, 0], [1], [1]>} : vector<8x4x8xf32>, vector<8x4x8xf32>, vector<4x8x8xf32> -> vector<4x8x8xf32>
    "tpu.trace_stop"() : () -> ()
    %cst_6 = arith.constant 0.353553385 : f32
    %21 = vector.broadcast %cst_6 : f32 to vector<4x8x8xf32>
    %22 = arith.mulf %20, %21 : vector<4x8x8xf32>
    %cst_7 = arith.constant dense<0xFF800000> : vector<4x8xf32>
    %23 = vector.multi_reduction <maximumf>, %22, %cst_7 [2] : vector<4x8x8xf32> to vector<4x8xf32>
    %24 = vector.shape_cast %23 : vector<4x8xf32> to vector<4x8x1xf32>
    %25 = vector.broadcast %24 : vector<4x8x1xf32> to vector<4x8x8xf32>
    %26 = arith.subf %22, %25 : vector<4x8x8xf32>
    %27 = math.exp %26 : vector<4x8x8xf32>
    %cst_8 = arith.constant dense<0.000000e+00> : vector<4x8xf32>
    %28 = vector.multi_reduction <add>, %27, %cst_8 [2] : vector<4x8x8xf32> to vector<4x8xf32>
    %29 = vector.shape_cast %28 : vector<4x8xf32> to vector<4x8x1xf32>
    %30 = vector.broadcast %29 : vector<4x8x1xf32> to vector<4x8x8xf32>
    %31 = arith.divf %27, %30 : vector<4x8x8xf32>
    "tpu.trace_start"() <{level = 10 : i32, message = "hqk,khd->qhd"}> : () -> ()
    %cst_9 = arith.constant dense<0.000000e+00> : vector<4x8x8xf32>
    %32 = tpu.matmul %19, %31, %cst_9 {dimension_numbers = #tpu.dot_dimension_numbers<[0], [2], [2], [1], [0, 1, 0, 2, 1, 1], [1], [0]>} : vector<8x4x8xf32>, vector<4x8x8xf32>, vector<4x8x8xf32> -> vector<4x8x8xf32>
    %33 = tpu.transpose %32, [2, 0, 1] : vector<4x8x8xf32> -> vector<8x4x8xf32>
    "tpu.trace_stop"() : () -> ()
    %34 = vector.shape_cast %33 : vector<8x4x8xf32> to vector<8x32xf32>
    %c0_10 = arith.constant 0 : index
    %c0_11 = arith.constant 0 : index
    %35 = vector.load %arg3[%c0_10, %c0_11] : memref<32x32xf32, #tpu.memory_space<vmem>>, vector<32x32xf32>
    %cst_12 = arith.constant dense<0.000000e+00> : vector<8x32xf32>
    %36 = tpu.matmul %34, %35, %cst_12 {dimension_numbers = #tpu.dot_dimension_numbers<[1], [0], [0], [1], [0, 0, 1, 1], [], []>} : vector<8x32xf32>, vector<32x32xf32>, vector<8x32xf32> -> vector<8x32xf32>
    %37 = vector.broadcast %4 : vector<1x32xf32> to vector<8x32xf32>
    %38 = arith.addf %36, %37 : vector<8x32xf32>
    %39 = arith.addf %0, %38 : vector<8x32xf32>
    %cst_13 = arith.constant dense<0.000000e+00> : vector<8xf32>
    %40 = vector.multi_reduction <add>, %39, %cst_13 [1] : vector<8x32xf32> to vector<8xf32>
    %41 = vector.shape_cast %40 : vector<8xf32> to vector<8x1xf32>
    %cst_14 = arith.constant 3.200000e+01 : f32
    %42 = vector.broadcast %cst_14 : f32 to vector<8x1xf32>
    %43 = arith.divf %41, %42 : vector<8x1xf32>
    %44 = vector.broadcast %43 : vector<8x1xf32> to vector<8x32xf32>
    %45 = arith.subf %39, %44 : vector<8x32xf32>
    %46 = arith.mulf %45, %45 : vector<8x32xf32>
    %cst_15 = arith.constant dense<0.000000e+00> : vector<8xf32>
    %47 = vector.multi_reduction <add>, %46, %cst_15 [1] : vector<8x32xf32> to vector<8xf32>
    %48 = vector.shape_cast %47 : vector<8xf32> to vector<8x1xf32>
    %cst_16 = arith.constant 3.200000e+01 : f32
    %49 = vector.broadcast %cst_16 : f32 to vector<8x1xf32>
    %50 = arith.divf %48, %49 : vector<8x1xf32>
    %cst_17 = arith.constant 9.99999974E-6 : f32
    %51 = vector.broadcast %cst_17 : f32 to vector<8x1xf32>
    %52 = arith.addf %50, %51 : vector<8x1xf32>
    %53 = math.rsqrt %52 : vector<8x1xf32>
    %54 = vector.broadcast %53 : vector<8x1xf32> to vector<8x32xf32>
    %55 = arith.mulf %45, %54 : vector<8x32xf32>
    %56 = vector.broadcast %6 : vector<1x32xf32> to vector<8x32xf32>
    %57 = arith.mulf %55, %56 : vector<8x32xf32>
    %58 = vector.broadcast %7 : vector<1x32xf32> to vector<8x32xf32>
    %59 = arith.addf %57, %58 : vector<8x32xf32>
    %c0_18 = arith.constant 0 : index
    %c0_19 = arith.constant 0 : index
    %60 = vector.load %arg4[%c0_18, %c0_19] : memref<32x64xf32, #tpu.memory_space<vmem>>, vector<32x64xf32>
    %cst_20 = arith.constant dense<0.000000e+00> : vector<8x64xf32>
    %61 = tpu.matmul %59, %60, %cst_20 {dimension_numbers = #tpu.dot_dimension_numbers<[1], [0], [0], [1], [0, 0, 1, 1], [], []>} : vector<8x32xf32>, vector<32x64xf32>, vector<8x64xf32> -> vector<8x64xf32>
    %62 = vector.broadcast %3 : vector<1x64xf32> to vector<8x64xf32>
    %63 = arith.addf %61, %62 : vector<8x64xf32>
    %cst_21 = arith.constant 0.000000e+00 : f32
    %64 = vector.broadcast %cst_21 : f32 to vector<8x64xf32>
    %65 = arith.maximumf %63, %64 : vector<8x64xf32>
    %c0_22 = arith.constant 0 : index
    %c0_23 = arith.constant 0 : index
    %66 = vector.load %arg5[%c0_22, %c0_23] : memref<64x32xf32, #tpu.memory_space<vmem>>, vector<64x32xf32>
    %cst_24 = arith.constant dense<0.000000e+00> : vector<8x32xf32>
    %67 = tpu.matmul %65, %66, %cst_24 {dimension_numbers = #tpu.dot_dimension_numbers<[1], [0], [0], [1], [0, 0, 1, 1], [], []>} : vector<8x64xf32>, vector<64x32xf32>, vector<8x32xf32> -> vector<8x32xf32>
    %68 = vector.broadcast %5 : vector<1x32xf32> to vector<8x32xf32>
    %69 = arith.addf %67, %68 : vector<8x32xf32>
    %70 = arith.addf %59, %69 : vector<8x32xf32>
    %cst_25 = arith.constant dense<0.000000e+00> : vector<8xf32>
    %71 = vector.multi_reduction <add>, %70, %cst_25 [1] : vector<8x32xf32> to vector<8xf32>
    %72 = vector.shape_cast %71 : vector<8xf32> to vector<8x1xf32>
    %cst_26 = arith.constant 3.200000e+01 : f32
    %73 = vector.broadcast %cst_26 : f32 to vector<8x1xf32>
    %74 = arith.divf %72, %73 : vector<8x1xf32>
    %75 = vector.broadcast %74 : vector<8x1xf32> to vector<8x32xf32>
    %76 = arith.subf %70, %75 : vector<8x32xf32>
    %77 = arith.mulf %76, %76 : vector<8x32xf32>
    %cst_27 = arith.constant dense<0.000000e+00> : vector<8xf32>
    %78 = vector.multi_reduction <add>, %77, %cst_27 [1] : vector<8x32xf32> to vector<8xf32>
    %79 = vector.shape_cast %78 : vector<8xf32> to vector<8x1xf32>
    %cst_28 = arith.constant 3.200000e+01 : f32
    %80 = vector.broadcast %cst_28 : f32 to vector<8x1xf32>
    %81 = arith.divf %79, %80 : vector<8x1xf32>
    %cst_29 = arith.constant 9.99999974E-6 : f32
    %82 = vector.broadcast %cst_29 : f32 to vector<8x1xf32>
    %83 = arith.addf %81, %82 : vector<8x1xf32>
    %84 = math.rsqrt %83 : vector<8x1xf32>
    %85 = vector.broadcast %84 : vector<8x1xf32> to vector<8x32xf32>
    %86 = arith.mulf %76, %85 : vector<8x32xf32>
    %87 = vector.broadcast %8 : vector<1x32xf32> to vector<8x32xf32>
    %88 = arith.mulf %86, %87 : vector<8x32xf32>
    %89 = vector.broadcast %9 : vector<1x32xf32> to vector<8x32xf32>
    %90 = arith.addf %88, %89 : vector<8x32xf32>
    %c0_30 = arith.constant 0 : index
    %c0_31 = arith.constant 0 : index
    %91 = vector.load %arg7[%c0_30, %c0_31] : memref<8x32xf32, #tpu.memory_space<vmem>>, vector<8x32xf32>
    tpu.vector_store %arg7[%c0_30, %c0_31], %90 {strides = array<i32>} : memref<8x32xf32, #tpu.memory_space<vmem>>, vector<8x32xf32>,
    return
  }
  func.func @transform_0(%arg0: i32) -> (i32, i32) {
    %c0_i32 = arith.constant 0 : i32
    %c0_i32_0 = arith.constant 0 : i32
    return %arg0, %c0_i32 : i32, i32
  }
  func.func @transform_1(%arg0: i32) -> (i32, i32) {
    %c0_i32 = arith.constant 0 : i32
    %c0_i32_0 = arith.constant 0 : i32
    %c0_i32_1 = arith.constant 0 : i32
    return %c0_i32, %c0_i32_0 : i32, i32
  }
  func.func @transform_2(%arg0: i32) -> (i32, i32) {
    %c0_i32 = arith.constant 0 : i32
    %c0_i32_0 = arith.constant 0 : i32
    %c0_i32_1 = arith.constant 0 : i32
    return %c0_i32, %c0_i32_0 : i32, i32
  }
  func.func @transform_3(%arg0: i32) -> (i32, i32) {
    %c0_i32 = arith.constant 0 : i32
    %c0_i32_0 = arith.constant 0 : i32
    %c0_i32_1 = arith.constant 0 : i32
    return %c0_i32, %c0_i32_0 : i32, i32
  }
  func.func @transform_4(%arg0: i32) -> (i32, i32) {
    %c0_i32 = arith.constant 0 : i32
    %c0_i32_0 = arith.constant 0 : i32
    %c0_i32_1 = arith.constant 0 : i32
    return %c0_i32, %c0_i32_0 : i32, i32
  }
  func.func @transform_5(%arg0: i32) -> (i32, i32) {
    %c0_i32 = arith.constant 0 : i32
    %c0_i32_0 = arith.constant 0 : i32
    %c0_i32_1 = arith.constant 0 : i32
    return %c0_i32, %c0_i32_0 : i32, i32
  }
  func.func @transform_6(%arg0: i32) -> (i32, i32) {
    %c0_i32 = arith.constant 0 : i32
    %c0_i32_0 = arith.constant 0 : i32
    return %arg0, %c0_i32 : i32, i32
  }
}

</mosaic_0001>

<llo_original>
// kernel: tpu_custom_call.1
$region0: #{tpu_custom_call.1}
  #allocation0 [shape = 'u32[]', space=smem, size = 0x4, offset = 0x4, fixed_abs, tag = 'smem constant byte address 0x4 - core index']
  #allocation1 [shape = 'u32[72,128]{1,0:T(1,128)}', space=vmem, size = 0x9000, scoped, tag = 'internal scratch']
  %s0 = inlined_call_operand.hbm [shape: f32[16,32], index: 0, kind: input, shape index: {}]
  %s1 = inlined_call_operand.vmem [shape: f32[32,96], index: 1, kind: input, shape index: {}]
  %s2 = inlined_call_operand.vmem [shape: f32[32,32], index: 2, kind: input, shape index: {}]
  %s3 = inlined_call_operand.vmem [shape: f32[32,64], index: 3, kind: input, shape index: {}]
  %s4 = inlined_call_operand.vmem [shape: f32[64,32], index: 4, kind: input, shape index: {}]
  %s5 = inlined_call_operand.hbm [shape: f32[8,96], index: 5, kind: input, shape index: {}]
  %s6 = inlined_call_operand.hbm [shape: f32[16,32], index: 6, kind: output, shape index: {}]
  %s7 = sld [smem:[#allocation0]]
  $region65: #{tpu_custom_call.1} parent=0
    _
  %s9 = ssub.s32 1, %s7
  %s10 = scalar_select 0, %s9, %s7
  $region1: #{tpu_custom_call.1} parent=0
    #allocation2 [shape = 'u8[8192]{0}', space=vmem, size = 0x2000, scoped, tag = 'input window, operand 0']
    #allocation3 [shape = 's32[2]{0}', space=sflag, size = 0x8, scoped, tag = 'scoped memory for tpu_custom_call.1']
    #allocation4 [shape = 's32[2]{0}', space=sflag, size = 0x8, scoped, tag = 'scoped memory for tpu_custom_call.1']
    #allocation5 [shape = 'u8[4096]{0}', space=vmem, size = 0x1000, scoped, tag = 'input window, operand 5, single buffered']
    #allocation6 [shape = 's32[1]{0}', space=sflag, size = 0x4, scoped, tag = 'scoped memory for tpu_custom_call.1']
    #allocation7 [shape = 'u8[8192]{0}', space=vmem, size = 0x2000, scoped, tag = 'output window, operand 0']
    %11 = vsyncpa [#allocation3], 0
    %s12 = scalar_lea.sflag [#allocation3], 1
    %13 = vsyncpa %s12, 0
    %14 = vsyncpa [#allocation6], 0
    %15 = vsyncpa [#allocation4], 0
    %s16 = scalar_lea.sflag [#allocation4], 1
    %17 = vsyncpa %s16, 0
    loop: start=0, step=1, limit=4
    $region2: #{tpu_custom_call.1} parent=1 // loop_pre_header
      _
    $region3: #{tpu_custom_call.1} parent=1 // loop_header
      %s19 = sphi 0, %s23
      %p20 = scmp.ge.s32.totalorder %s19, 4
      %s29 = sphi 0, %s31
      %s32 = sphi 0, %s29
      %s33 = sphi 0, %s32
      %s49 = sphi 0, %s33
      %s53 = sphi 0, %s53
      %s55 = sphi 0, %s53
      %s56 = sphi 0, %s55
      %s70 = sphi 0, %s56
      %s74 = sphi 0, %s74
      %s76 = sphi 0, %s74
      %s77 = sphi 0, %s76
      %s91 = sphi 0, %s77
      %s95 = sphi 0, %s95
      %s97 = sphi 0, %s95
      %s98 = sphi 0, %s97
      %s112 = sphi 0, %s98
      %s116 = sphi 0, %s116
      %s118 = sphi 0, %s116
      %s119 = sphi 0, %s118
      %s133 = sphi 0, %s119
      %s137 = sphi 0, %s137
      %s139 = sphi 0, %s137
      %s140 = sphi 0, %s139
      %s154 = sphi 0, %s140
      %s160 = sphi 0, %s162
      %s163 = sphi 0, %s160
      %s164 = sphi 0, %s163
      %s180 = sphi 0, %s164
    $region4: #{tpu_custom_call.1} parent=1 // loop_header_branch
      %22 = sbr.rel (%p20) target = $region8
    $region5: #{tpu_custom_call.1} parent=1 // loop_body
      %s24 = ssub.s32 %s19, 1
      %s25 = ssub.s32 %s19, 2
      %s26 = sadd.s32 %s19, 1
      %s27 = ssub.s32 %s19, %s26
      %p28 = scmp.eq.s32.totalorder %s27, 0
      %s30 = sadd.s32 %s29, 1
      %s31 = scalar_select %p28, %s29, %s30
      %p34 = pneg %p28
      %p35 = scmp.eq.s32.totalorder %s19, 1
      %p36 = por %p34, %p35
      %p37 = scmp.ne.s32.totalorder %s29, %s32
      %p38 = scmp.eq.s32.totalorder %s19, 0
      %p39 = por %p37, %p38
      %p40 = scmp.ne.s32.totalorder %s29, %s32
      %p41 = scmp.eq.s32.totalorder %s24, 1
      %p42 = por %p40, %p41
      %p43 = scmp.ne.s32.totalorder %s32, %s33
      %p44 = scmp.eq.s32.totalorder %s24, 0
      %p45 = por %p43, %p44
      %p46 = scmp.ne.s32.totalorder %s32, %s33
      %p47 = scmp.eq.s32.totalorder %s25, 1
      %p48 = por %p46, %p47
      %p50 = scmp.ne.s32.totalorder %s33, %s49
      %p51 = scmp.eq.s32.totalorder %s25, 0
      %p52 = por %p50, %p51
      %s54 = sadd.s32 %s53, 1
      %p57 = scmp.eq.s32.totalorder %s19, 1
      %p58 = scmp.ne.s32.totalorder %s53, %s55
      %p59 = scmp.eq.s32.totalorder %s19, 0
      %p60 = por %p58, %p59
      %p61 = scmp.ne.s32.totalorder %s53, %s55
      %p62 = scmp.eq.s32.totalorder %s24, 1
      %p63 = por %p61, %p62
      %p64 = scmp.ne.s32.totalorder %s55, %s56
      %p65 = scmp.eq.s32.totalorder %s24, 0
      %p66 = por %p64, %p65
      %p67 = scmp.ne.s32.totalorder %s55, %s56
      %p68 = scmp.eq.s32.totalorder %s25, 1
      %p69 = por %p67, %p68
      %p71 = scmp.ne.s32.totalorder %s56, %s70
      %p72 = scmp.eq.s32.totalorder %s25, 0
      %p73 = por %p71, %p72
      %s75 = sadd.s32 %s74, 1
      %p78 = scmp.eq.s32.totalorder %s19, 1
      %p79 = scmp.ne.s32.totalorder %s74, %s76
      %p80 = scmp.eq.s32.totalorder %s19, 0
      %p81 = por %p79, %p80
      %p82 = scmp.ne.s32.totalorder %s74, %s76
      %p83 = scmp.eq.s32.totalorder %s24, 1
      %p84 = por %p82, %p83
      %p85 = scmp.ne.s32.totalorder %s76, %s77
      %p86 = scmp.eq.s32.totalorder %s24, 0
      %p87 = por %p85, %p86
      %p88 = scmp.ne.s32.totalorder %s76, %s77
      %p89 = scmp.eq.s32.totalorder %s25, 1
      %p90 = por %p88, %p89
      %p92 = scmp.ne.s32.totalorder %s77, %s91
      %p93 = scmp.eq.s32.totalorder %s25, 0
      %p94 = por %p92, %p93
      %s96 = sadd.s32 %s95, 1
      %p99 = scmp.eq.s32.totalorder %s19, 1
      %p100 = scmp.ne.s32.totalorder %s95, %s97
      %p101 = scmp.eq.s32.totalorder %s19, 0
      %p102 = por %p100, %p101
      %p103 = scmp.ne.s32.totalorder %s95, %s97
      %p104 = scmp.eq.s32.totalorder %s24, 1
      %p105 = por %p103, %p104
      %p106 = scmp.ne.s32.totalorder %s97, %s98
      %p107 = scmp.eq.s32.totalorder %s24, 0
      %p108 = por %p106, %p107
      %p109 = scmp.ne.s32.totalorder %s97, %s98
      %p110 = scmp.eq.s32.totalorder %s25, 1
      %p111 = por %p109, %p110
      %p113 = scmp.ne.s32.totalorder %s98, %s112
      %p114 = scmp.eq.s32.totalorder %s25, 0
      %p115 = por %p113, %p114
      %s117 = sadd.s32 %s116, 1
      %p120 = scmp.eq.s32.totalorder %s19, 1
      %p121 = scmp.ne.s32.totalorder %s116, %s118
      %p122 = scmp.eq.s32.totalorder %s19, 0
      %p123 = por %p121, %p122
      %p124 = scmp.ne.s32.totalorder %s116, %s118
      %p125 = scmp.eq.s32.totalorder %s24, 1
      %p126 = por %p124, %p125
      %p127 = scmp.ne.s32.totalorder %s118, %s119
      %p128 = scmp.eq.s32.totalorder %s24, 0
      %p129 = por %p127, %p128
      %p130 = scmp.ne.s32.totalorder %s118, %s119
      %p131 = scmp.eq.s32.totalorder %s25, 1
      %p132 = por %p130, %p131
      %p134 = scmp.ne.s32.totalorder %s119, %s133
      %p135 = scmp.eq.s32.totalorder %s25, 0
      %p136 = por %p134, %p135
      %s138 = sadd.s32 %s137, 1
      %p141 = scmp.eq.s32.totalorder %s19, 1
      %p142 = scmp.ne.s32.totalorder %s137, %s139
      %p143 = scmp.eq.s32.totalorder %s19, 0
      %p144 = por %p142, %p143
      %p145 = scmp.ne.s32.totalorder %s137, %s139
      %p146 = scmp.eq.s32.totalorder %s24, 1
      %p147 = por %p145, %p146
      %p148 = scmp.ne.s32.totalorder %s139, %s140
      %p149 = scmp.eq.s32.totalorder %s24, 0
      %p150 = por %p148, %p149
      %p151 = scmp.ne.s32.totalorder %s139, %s140
      %p152 = scmp.eq.s32.totalorder %s25, 1
      %p153 = por %p151, %p152
      %p155 = scmp.ne.s32.totalorder %s140, %s154
      %p156 = scmp.eq.s32.totalorder %s25, 0
      %p157 = por %p155, %p156
      %s158 = ssub.s32 %s19, %s26
      %p159 = scmp.eq.s32.totalorder %s158, 0
      %s161 = sadd.s32 %s160, 1
      %s162 = scalar_select %p159, %s160, %s161
      %p165 = pneg %p159
      %p166 = scmp.eq.s32.totalorder %s19, 1
      %p167 = por %p165, %p166
      %p168 = scmp.ne.s32.totalorder %s160, %s163
      %p169 = scmp.eq.s32.totalorder %s19, 0
      %p170 = por %p168, %p169
      %p171 = scmp.ne.s32.totalorder %s160, %s163
      %p172 = scmp.eq.s32.totalorder %s24, 1
      %p173 = por %p171, %p172
      %p174 = scmp.ne.s32.totalorder %s163, %s164
      %p175 = scmp.eq.s32.totalorder %s24, 0
      %p176 = por %p174, %p175
      %p177 = scmp.ne.s32.totalorder %s163, %s164
      %p178 = scmp.eq.s32.totalorder %s25, 1
      %p179 = por %p177, %p178
      %p181 = scmp.ne.s32.totalorder %s164, %s180
      %p182 = scmp.eq.s32.totalorder %s25, 0
      %p183 = por %p181, %p182
      %p184 = scmp.le.s32.totalorder 1, %s19
      %p185 = scmp.lt.s32.totalorder %s19, 3
      %p186 = pnand %p184, %p185
      %p187 = pneg %p186
      // Predicated region
      $region9: #{tpu_custom_call.1} parent=5 // pred_check
        _
      $region10: #{tpu_custom_call.1} parent=5 // pred_check_branch
        %189 = sbr.rel (%p186) target = $region12
      $region11: #{tpu_custom_call.1} parent=5 // pred_region
        %s190 = ssub.s32 %s19, 1
        // Predicated region
        $region13: #{tpu_custom_call.1} parent=11 // pred_check
          %p191 = pneg %p66
        $region14: #{tpu_custom_call.1} parent=11 // pred_check_branch
          %193 = sbr.rel (%p191) target = $region16
        $region15: #{tpu_custom_call.1} parent=11 // pred_region
          _
        $region16: #{tpu_custom_call.1} parent=11 // pred_fallthru
          _
        // Predicated region
        $region17: #{tpu_custom_call.1} parent=11 // pred_check
          %p194 = pneg %p87
        $region18: #{tpu_custom_call.1} parent=11 // pred_check_branch
          %196 = sbr.rel (%p194) target = $region20
        $region19: #{tpu_custom_call.1} parent=11 // pred_region
          _
        $region20: #{tpu_custom_call.1} parent=11 // pred_fallthru
          _
        // Predicated region
        $region21: #{tpu_custom_call.1} parent=11 // pred_check
          %p197 = pneg %p108
        $region22: #{tpu_custom_call.1} parent=11 // pred_check_branch
          %199 = sbr.rel (%p197) target = $region24
        $region23: #{tpu_custom_call.1} parent=11 // pred_region
          _
        $region24: #{tpu_custom_call.1} parent=11 // pred_fallthru
          _
        // Predicated region
        $region25: #{tpu_custom_call.1} parent=11 // pred_check
          %p200 = pneg %p129
        $region26: #{tpu_custom_call.1} parent=11 // pred_check_branch
          %202 = sbr.rel (%p200) target = $region28
        $region27: #{tpu_custom_call.1} parent=11 // pred_region
          _
        $region28: #{tpu_custom_call.1} parent=11 // pred_fallthru
          _
        // Predicated region
        $region29: #{tpu_custom_call.1} parent=11 // pred_check
          %p203 = pneg %p150
        $region30: #{tpu_custom_call.1} parent=11 // pred_check_branch
          %205 = sbr.rel (%p203) target = $region32
        $region31: #{tpu_custom_call.1} parent=11 // pred_region
          %207 = vsyncadd [#allocation6], 0
          %s209 = sshll.u32 %s5, 4
          %s210 = int_to_ptr.hbm [resolvable:$true] %s209
          %s211 = sshll.u32 [#allocation5], 4
          %s212 = int_to_ptr.vmem [resolvable:$true] %s211
          %214 = dma.hbm_to_vmem [thread:$0]  %s210, 128, %s212, [#allocation6]
        $region32: #{tpu_custom_call.1} parent=11 // pred_fallthru
          _
      $region12: #{tpu_custom_call.1} parent=5 // pred_fallthru
        _
      %p215 = scmp.lt.s32.totalorder %s19, 2
      // Predicated region
      $region33: #{tpu_custom_call.1} parent=5 // pred_check
        %p216 = pneg %p215
      $region34: #{tpu_custom_call.1} parent=5 // pred_check_branch
        %218 = sbr.rel (%p216) target = $region36
      $region35: #{tpu_custom_call.1} parent=5 // pred_region
        // Predicated region
        $region37: #{tpu_custom_call.1} parent=35 // pred_check
          %p219 = pneg %p39
        $region38: #{tpu_custom_call.1} parent=35 // pred_check_branch
          %221 = sbr.rel (%p219) target = $region40
        $region39: #{tpu_custom_call.1} parent=35 // pred_region
          %s222 = sand.u32 %s29, 1
          %s223 = scalar_lea.sflag [#allocation3], %s222
          %s224 = sand.u32 %s29, 1
          %s225 = smul.addr %s224, 8
          %s226 = scalar_lea.vmem [#allocation2], %s225
          %228 = vsyncadd %s223, 0
          %s229 = smul.addr %s19, 8
          %s230 = scalar_lea.hbm %s0, %s229
          %s232 = sshll.u32 %s230, 4
          %s233 = int_to_ptr.hbm [resolvable:$true] %s232
          %s234 = sshll.u32 %s226, 4
          %s235 = int_to_ptr.vmem [resolvable:$true] %s234
          %237 = dma.hbm_to_vmem [thread:$0]  %s233, 128, %s235, %s223
        $region40: #{tpu_custom_call.1} parent=35 // pred_fallthru
          _
      $region36: #{tpu_custom_call.1} parent=5 // pred_fallthru
        _
      %p238 = scmp.le.s32.totalorder 1, %s19
      %p239 = scmp.lt.s32.totalorder %s19, 3
      %p240 = pnand %p238, %p239
      %p241 = pneg %p240
      // Predicated region
      $region41: #{tpu_custom_call.1} parent=5 // pred_check
        _
      $region42: #{tpu_custom_call.1} parent=5 // pred_check_branch
        %243 = sbr.rel (%p240) target = $region44
      $region43: #{tpu_custom_call.1} parent=5 // pred_region
        %s244 = ssub.s32 %s19, 1
        %s245 = sand.u32 %s32, 1
        %s246 = scalar_lea.sflag [#allocation3], %s245
        %s247 = sand.u32 %s32, 1
        %s248 = smul.addr %s247, 8
        %s249 = scalar_lea.vmem [#allocation2], %s248
        // Predicated region
        $region45: #{tpu_custom_call.1} parent=43 // pred_check
          %p250 = pneg %p45
        $region46: #{tpu_custom_call.1} parent=43 // pred_check_branch
          %252 = sbr.rel (%p250) target = $region48
        $region47: #{tpu_custom_call.1} parent=43 // pred_region
          %254 = dma.done %s246, 128
        $region48: #{tpu_custom_call.1} parent=43 // pred_fallthru
          _
        // Predicated region
        $region49: #{tpu_custom_call.1} parent=43 // pred_check
          %p255 = pneg %p150
        $region50: #{tpu_custom_call.1} parent=43 // pred_check_branch
          %257 = sbr.rel (%p255) target = $region52
        $region51: #{tpu_custom_call.1} parent=43 // pred_region
          %259 = dma.done [#allocation6], 128
        $region52: #{tpu_custom_call.1} parent=43 // pred_fallthru
          _
        %s260 = sand.u32 %s32, 1
        %s261 = scalar_lea.sflag [#allocation3], %s260
        %s262 = sand.u32 %s32, 1
        %s263 = smul.addr %s262, 8
        %s264 = scalar_lea.vmem [#allocation2], %s263
        %p265 = pneg %p45
        %p266 = pneg %p42
        %p267 = pneg %p66
        %p268 = pneg %p63
        %p269 = pneg %p87
        %p270 = pneg %p84
        %p271 = pneg %p108
        %p272 = pneg %p105
        %p273 = pneg %p129
        %p274 = pneg %p126
        %p275 = pneg %p150
        %p276 = pneg %p147
        %p277 = pneg %p176
        %p278 = pneg %p173
        %s279 = sand.u32 %s163, 1
        %s280 = scalar_lea.sflag [#allocation4], %s279
        %s281 = sand.u32 %s163, 1
        %s282 = smul.addr %s281, 8
        %s283 = scalar_lea.vmem [#allocation7], %s282
        %v284 = vld [vmem:[%s249] sm:$0xff]
        %v285 = vld [vmem:[#allocation5] sm:$0xff]
        %v286 = vld [vmem:[%s1] sm:$0xff]
        %v287 = vld [vmem:[%s1 + $0x8] sm:$0xff]
        %v288 = vld [vmem:[%s1 + $0x10] sm:$0xff]
        %v289 = vld [vmem:[%s1 + $0x18] sm:$0xff]
        %v290 = vperm.slane %v285, 0
        %vm291 = vcmask 261120
        %v293 = vsel %vm291, %v284, 0
        %295 = vmatpush.msra.mxu0 0.0
        %296 = vmatpush.msra.mxu0 0.0
        %297 = vmatpush.msra.mxu0 0.0
        %298 = vmatpush.msra.mxu0 0.0
        %299 = vmatpush.msra.mxu0 0.0
        %300 = vmatpush.msra.mxu0 0.0
        %301 = vmatpush.msra.mxu0 0.0
        %302 = vmatpush.msra.mxu0 0.0
        %303 = vmatpush.msra.mxu0 0.0
        %304 = vmatpush.msra.mxu0 0.0
        %305 = vmatpush.msra.mxu0 0.0
        %306 = vmatpush.msra.mxu0 0.0
        %307 = vmatpush.msra.mxu0 %v289
        %308 = vmatpush.msra.mxu0 %v288
        %309 = vmatpush.msra.mxu0 %v287
        %310 = vmatpush.msra.mxu0 %v286
        %311 = vmatmul.f32.gmra.mxu0 %v293
        %v312 = vpop.f32.mrf.mxu0
        %v313 = vadd.f32 %v290, %v312
        %314 = vdwg.mxu0
        %316 = vrot.lane.b32.xlu0 %v313, 120
        %v317 = vpop.permute.xlu0 %316
        %318 = vrot.lane.b32.xlu0 %v313, 112
        %v319 = vpop.permute.xlu0 %318
        %320 = vrot.lane.b32.xlu0 %v313, 104
        %v321 = vpop.permute.xlu0 %320
        %322 = vrot.lane.b32.xlu0 %v313, 96
        %v323 = vpop.permute.xlu0 %322
        %324 = vrot.lane.b32.xlu0 %v317, 96
        %v325 = vpop.permute.xlu0 %324
        %326 = vrot.lane.b32.xlu0 %v319, 96
        %v327 = vpop.permute.xlu0 %326
        %328 = vrot.lane.b32.xlu0 %v321, 96
        %v329 = vpop.permute.xlu0 %328
        %334 = vxpose.xlu0.b32.start [1/16] %v323, 128
        %335 = vxpose.xlu0.b32.cont [2/16] 0.0, 128
        %336 = vxpose.xlu0.b32.cont [3/16] 0.0, 128
        %337 = vxpose.xlu0.b32.cont [4/16] 0.0, 128
        %338 = vxpose.xlu0.b32.cont [5/16] 0.0, 128
        %339 = vxpose.xlu0.b32.cont [6/16] 0.0, 128
        %340 = vxpose.xlu0.b32.cont [7/16] 0.0, 128
        %341 = vxpose.xlu0.b32.cont [8/16] 0.0, 128
        %342 = vxpose.xlu0.b32.cont [9/16] 0.0, 128
        %343 = vxpose.xlu0.b32.cont [10/16] 0.0, 128
        %344 = vxpose.xlu0.b32.cont [11/16] 0.0, 128
        %345 = vxpose.xlu0.b32.cont [12/16] 0.0, 128
        %346 = vxpose.xlu0.b32.cont [13/16] 0.0, 128
        %347 = vxpose.xlu0.b32.cont [14/16] 0.0, 128
        %348 = vxpose.xlu0.b32.cont [15/16] 0.0, 128
        %349 = vxpose.xlu0.b32.end [16/16] 0.0, 128
        %v350 = vpop.trf.xlu0
        %v351 = vpop.trf.xlu0
        %v352 = vpop.trf.xlu0
        %v353 = vpop.trf.xlu0
        %v354 = vpop.trf.xlu0
        %v355 = vpop.trf.xlu0
        %v356 = vpop.trf.xlu0
        %v357 = vpop.trf.xlu0
        %v358 = vpop.trf.xlu0
        %v359 = vpop.trf.xlu0
        %v360 = vpop.trf.xlu0
        %v361 = vpop.trf.xlu0
        %v362 = vpop.trf.xlu0
        %v363 = vpop.trf.xlu0
        %v364 = vpop.trf.xlu0
        %v365 = vpop.trf.xlu0
        %366 = vxpose.xlu0.b32.start [1/16] %v325, 128
        %367 = vxpose.xlu0.b32.cont [2/16] 0.0, 128
        %368 = vxpose.xlu0.b32.cont [3/16] 0.0, 128
        %369 = vxpose.xlu0.b32.cont [4/16] 0.0, 128
        %370 = vxpose.xlu0.b32.cont [5/16] 0.0, 128
        %371 = vxpose.xlu0.b32.cont [6/16] 0.0, 128
        %372 = vxpose.xlu0.b32.cont [7/16] 0.0, 128
        %373 = vxpose.xlu0.b32.cont [8/16] 0.0, 128
        %374 = vxpose.xlu0.b32.cont [9/16] 0.0, 128
        %375 = vxpose.xlu0.b32.cont [10/16] 0.0, 128
        %376 = vxpose.xlu0.b32.cont [11/16] 0.0, 128
        %377 = vxpose.xlu0.b32.cont [12/16] 0.0, 128
        %378 = vxpose.xlu0.b32.cont [13/16] 0.0, 128
        %379 = vxpose.xlu0.b32.cont [14/16] 0.0, 128
        %380 = vxpose.xlu0.b32.cont [15/16] 0.0, 128
        %381 = vxpose.xlu0.b32.end [16/16] 0.0, 128
        %v382 = vpop.trf.xlu0
        %v383 = vpop.trf.xlu0
        %v384 = vpop.trf.xlu0
        %v385 = vpop.trf.xlu0
        %v386 = vpop.trf.xlu0
        %v387 = vpop.trf.xlu0
        %v388 = vpop.trf.xlu0
        %v389 = vpop.trf.xlu0
        %v390 = vpop.trf.xlu0
        %v391 = vpop.trf.xlu0
        %v392 = vpop.trf.xlu0
        %v393 = vpop.trf.xlu0
        %v394 = vpop.trf.xlu0
        %v395 = vpop.trf.xlu0
        %v396 = vpop.trf.xlu0
        %v397 = vpop.trf.xlu0
        %398 = vxpose.xlu0.b32.start [1/16] %v327, 128
        %399 = vxpose.xlu0.b32.cont [2/16] 0.0, 128
        %400 = vxpose.xlu0.b32.cont [3/16] 0.0, 128
        %401 = vxpose.xlu0.b32.cont [4/16] 0.0, 128
        %402 = vxpose.xlu0.b32.cont [5/16] 0.0, 128
        %403 = vxpose.xlu0.b32.cont [6/16] 0.0, 128
        %404 = vxpose.xlu0.b32.cont [7/16] 0.0, 128
        %405 = vxpose.xlu0.b32.cont [8/16] 0.0, 128
        %406 = vxpose.xlu0.b32.cont [9/16] 0.0, 128
        %407 = vxpose.xlu0.b32.cont [10/16] 0.0, 128
        %408 = vxpose.xlu0.b32.cont [11/16] 0.0, 128
        %409 = vxpose.xlu0.b32.cont [12/16] 0.0, 128
        %410 = vxpose.xlu0.b32.cont [13/16] 0.0, 128
        %411 = vxpose.xlu0.b32.cont [14/16] 0.0, 128
        %412 = vxpose.xlu0.b32.cont [15/16] 0.0, 128
        %413 = vxpose.xlu0.b32.end [16/16] 0.0, 128
        %v414 = vpop.trf.xlu0
        %v415 = vpop.trf.xlu0
        %v416 = vpop.trf.xlu0
        %v417 = vpop.trf.xlu0
        %v418 = vpop.trf.xlu0
        %v419 = vpop.trf.xlu0
        %v420 = vpop.trf.xlu0
        %v421 = vpop.trf.xlu0
        %v422 = vpop.trf.xlu0
        %v423 = vpop.trf.xlu0
        %v424 = vpop.trf.xlu0
        %v425 = vpop.trf.xlu0
        %v426 = vpop.trf.xlu0
        %v427 = vpop.trf.xlu0
        %v428 = vpop.trf.xlu0
        %v429 = vpop.trf.xlu0
        %430 = vxpose.xlu0.b32.start [1/16] %v329, 128
        %431 = vxpose.xlu0.b32.cont [2/16] 0.0, 128
        %432 = vxpose.xlu0.b32.cont [3/16] 0.0, 128
        %433 = vxpose.xlu0.b32.cont [4/16] 0.0, 128
        %434 = vxpose.xlu0.b32.cont [5/16] 0.0, 128
        %435 = vxpose.xlu0.b32.cont [6/16] 0.0, 128
        %436 = vxpose.xlu0.b32.cont [7/16] 0.0, 128
        %437 = vxpose.xlu0.b32.cont [8/16] 0.0, 128
        %438 = vxpose.xlu0.b32.cont [9/16] 0.0, 128
        %439 = vxpose.xlu0.b32.cont [10/16] 0.0, 128
        %440 = vxpose.xlu0.b32.cont [11/16] 0.0, 128
        %441 = vxpose.xlu0.b32.cont [12/16] 0.0, 128
        %442 = vxpose.xlu0.b32.cont [13/16] 0.0, 128
        %443 = vxpose.xlu0.b32.cont [14/16] 0.0, 128
        %444 = vxpose.xlu0.b32.cont [15/16] 0.0, 128
        %445 = vxpose.xlu0.b32.end [16/16] 0.0, 128
        %v446 = vpop.trf.xlu0
        %v447 = vpop.trf.xlu0
        %v448 = vpop.trf.xlu0
        %v449 = vpop.trf.xlu0
        %v450 = vpop.trf.xlu0
        %v451 = vpop.trf.xlu0
        %v452 = vpop.trf.xlu0
        %v453 = vpop.trf.xlu0
        %v454 = vpop.trf.xlu0
        %v455 = vpop.trf.xlu0
        %v456 = vpop.trf.xlu0
        %v457 = vpop.trf.xlu0
        %v458 = vpop.trf.xlu0
        %v459 = vpop.trf.xlu0
        %v460 = vpop.trf.xlu0
        %v461 = vpop.trf.xlu0
        %vm462 = vcmask 64512
        %v463 = vsel %vm462, %v313, 0
        %465 = vmatpush.msra.mxu0 0.0
        %466 = vmatpush.msra.mxu0 0.0
        %467 = vmatpush.msra.mxu0 0.0
        %468 = vmatpush.msra.mxu0 0.0
        %469 = vmatpush.msra.mxu0 0.0
        %470 = vmatpush.msra.mxu0 0.0
        %471 = vmatpush.msra.mxu0 0.0
        %472 = vmatpush.msra.mxu0 0.0
        %473 = vmatpush.msra.mxu0 0.0
        %474 = vmatpush.msra.mxu0 0.0
        %475 = vmatpush.msra.mxu0 0.0
        %476 = vmatpush.msra.mxu0 0.0
        %477 = vmatpush.msra.mxu0 0.0
        %478 = vmatpush.msra.mxu0 0.0
        %479 = vmatpush.msra.mxu0 0.0
        %480 = vmatpush.msra.mxu0 %v350
        %481 = vmatmul.f32.gmra.mxu0 %v463
        %v482 = vpop.f32.mrf.mxu0
        %v483 = vadd.f32 0.0, %v482
        %484 = vdwg.mxu0
        %v485 = vsel %vm462, %v317, 0
        %487 = vmatpush.msra.mxu0 0.0
        %488 = vmatpush.msra.mxu0 0.0
        %489 = vmatpush.msra.mxu0 0.0
        %490 = vmatpush.msra.mxu0 0.0
        %491 = vmatpush.msra.mxu0 0.0
        %492 = vmatpush.msra.mxu0 0.0
        %493 = vmatpush.msra.mxu0 0.0
        %494 = vmatpush.msra.mxu0 0.0
        %495 = vmatpush.msra.mxu0 0.0
        %496 = vmatpush.msra.mxu0 0.0
        %497 = vmatpush.msra.mxu0 0.0
        %498 = vmatpush.msra.mxu0 0.0
        %499 = vmatpush.msra.mxu0 0.0
        %500 = vmatpush.msra.mxu0 0.0
        %501 = vmatpush.msra.mxu0 0.0
        %502 = vmatpush.msra.mxu0 %v382
        %503 = vmatmul.f32.gmra.mxu0 %v485
        %v504 = vpop.f32.mrf.mxu0
        %v505 = vadd.f32 0.0, %v504
        %506 = vdwg.mxu0
        %v507 = vsel %vm462, %v319, 0
        %509 = vmatpush.msra.mxu0 0.0
        %510 = vmatpush.msra.mxu0 0.0
        %511 = vmatpush.msra.mxu0 0.0
        %512 = vmatpush.msra.mxu0 0.0
        %513 = vmatpush.msra.mxu0 0.0
        %514 = vmatpush.msra.mxu0 0.0
        %515 = vmatpush.msra.mxu0 0.0
        %516 = vmatpush.msra.mxu0 0.0
        %517 = vmatpush.msra.mxu0 0.0
        %518 = vmatpush.msra.mxu0 0.0
        %519 = vmatpush.msra.mxu0 0.0
        %520 = vmatpush.msra.mxu0 0.0
        %521 = vmatpush.msra.mxu0 0.0
        %522 = vmatpush.msra.mxu0 0.0
        %523 = vmatpush.msra.mxu0 0.0
        %524 = vmatpush.msra.mxu0 %v414
        %525 = vmatmul.f32.gmra.mxu0 %v507
        %v526 = vpop.f32.mrf.mxu0
        %v527 = vadd.f32 0.0, %v526
        %528 = vdwg.mxu0
        %v529 = vsel %vm462, %v321, 0
        %531 = vmatpush.msra.mxu0 0.0
        %532 = vmatpush.msra.mxu0 0.0
        %533 = vmatpush.msra.mxu0 0.0
        %534 = vmatpush.msra.mxu0 0.0
        %535 = vmatpush.msra.mxu0 0.0
        %536 = vmatpush.msra.mxu0 0.0
        %537 = vmatpush.msra.mxu0 0.0
        %538 = vmatpush.msra.mxu0 0.0
        %539 = vmatpush.msra.mxu0 0.0
        %540 = vmatpush.msra.mxu0 0.0
        %541 = vmatpush.msra.mxu0 0.0
        %542 = vmatpush.msra.mxu0 0.0
        %543 = vmatpush.msra.mxu0 0.0
        %544 = vmatpush.msra.mxu0 0.0
        %545 = vmatpush.msra.mxu0 0.0
        %546 = vmatpush.msra.mxu0 %v446
        %547 = vmatmul.f32.gmra.mxu0 %v529
        %v548 = vpop.f32.mrf.mxu0
        %v549 = vadd.f32 0.0, %v548
        %550 = vdwg.mxu0
        %v551 = vmul.f32 %v483, 0.35355338
        %v552 = vmul.f32 %v505, 0.35355338
        %v553 = vmul.f32 %v527, 0.35355338
        %v554 = vmul.f32 %v549, 0.35355338
        %v555 = vsel %vm462, %v551, -inf
        %556 = vmax.xlane.f32.xlu0 %v555
        %v557 = vpop.xlane.xlu0 %556
        %v558 = vsel %vm462, %v552, -inf
        %559 = vmax.xlane.f32.xlu0 %v558
        %v560 = vpop.xlane.xlu0 %559
        %v561 = vsel %vm462, %v553, -inf
        %562 = vmax.xlane.f32.xlu0 %v561
        %v563 = vpop.xlane.xlu0 %562
        %v564 = vsel %vm462, %v554, -inf
        %565 = vmax.xlane.f32.xlu0 %v564
        %v566 = vpop.xlane.xlu0 %565
        %v567 = vsub.f32 %v551, %v557
        %v568 = vsub.f32 %v552, %v560
        %v569 = vsub.f32 %v553, %v563
        %v570 = vsub.f32 %v554, %v566
        %v571 = vmul.f32 %v567, 1.442695
        %v572 = vpow.pop %v571
        %v573 = vmul.f32 %v568, 1.442695
        %v574 = vpow.pop %v573
        %v575 = vmul.f32 %v569, 1.442695
        %v576 = vpow.pop %v575
        %v577 = vmul.f32 %v570, 1.442695
        %v578 = vpow.pop %v577
        %v579 = vsel %vm462, %v572, 0.0
        %580 = vadd.xlane.f32.xlu0 %v579
        %v581 = vpop.xlane.xlu0 %580
        %v582 = vsel %vm462, %v574, 0.0
        %583 = vadd.xlane.f32.xlu0 %v582
        %v584 = vpop.xlane.xlu0 %583
        %v585 = vsel %vm462, %v576, 0.0
        %586 = vadd.xlane.f32.xlu0 %v585
        %v587 = vpop.xlane.xlu0 %586
        %v588 = vsel %vm462, %v578, 0.0
        %589 = vadd.xlane.f32.xlu0 %v588
        %v590 = vpop.xlane.xlu0 %589
        %v591 = vrcp.pop %v581
        %v592 = vmul.f32 %v581, %v591
        %v593 = vsub.f32 1.0, %v592
        %v594 = vmul.f32 %v591, %v593
        %v595 = vadd.f32 %v591, %v594
        %vm596 = vweird.f32 %v581
        %vm597 = vweird.f32 %v591
        %vm598 = vmor %vm596, %vm597
        %v599 = vsel %vm598, %v591, %v595
        %v600 = vand.u32 2147483647, %v581
        %vm601 = vcmp.eq.f32.partialorder %v600, 8.507059e+37
        %v602 = vand.u32 %v581, 2147483648
        %v603 = vor.u32 1.1754944e-38, %v602
        %v604 = vsel %vm601, %v603, %v599
        %v605 = vmul.f32 %v572, %v604
        %v606 = vrcp.pop %v584
        %v607 = vmul.f32 %v584, %v606
        %v608 = vsub.f32 1.0, %v607
        %v609 = vmul.f32 %v606, %v608
        %v610 = vadd.f32 %v606, %v609
        %vm611 = vweird.f32 %v584
        %vm612 = vweird.f32 %v606
        %vm613 = vmor %vm611, %vm612
        %v614 = vsel %vm613, %v606, %v610
        %v615 = vand.u32 2147483647, %v584
        %vm616 = vcmp.eq.f32.partialorder %v615, 8.507059e+37
        %v617 = vand.u32 %v584, 2147483648
        %v618 = vor.u32 1.1754944e-38, %v617
        %v619 = vsel %vm616, %v618, %v614
        %v620 = vmul.f32 %v574, %v619
        %v621 = vrcp.pop %v587
        %v622 = vmul.f32 %v587, %v621
        %v623 = vsub.f32 1.0, %v622
        %v624 = vmul.f32 %v621, %v623
        %v625 = vadd.f32 %v621, %v624
        %vm626 = vweird.f32 %v587
        %vm627 = vweird.f32 %v621
        %vm628 = vmor %vm626, %vm627
        %v629 = vsel %vm628, %v621, %v625
        %v630 = vand.u32 2147483647, %v587
        %vm631 = vcmp.eq.f32.partialorder %v630, 8.507059e+37
        %v632 = vand.u32 %v587, 2147483648
        %v633 = vor.u32 1.1754944e-38, %v632
        %v634 = vsel %vm631, %v633, %v629
        %v635 = vmul.f32 %v576, %v634
        %v636 = vrcp.pop %v590
        %v637 = vmul.f32 %v590, %v636
        %v638 = vsub.f32 1.0, %v637
        %v639 = vmul.f32 %v636, %v638
        %v640 = vadd.f32 %v636, %v639
        %vm641 = vweird.f32 %v590
        %vm642 = vweird.f32 %v636
        %vm643 = vmor %vm641, %vm642
        %v644 = vsel %vm643, %v636, %v640
        %v645 = vand.u32 2147483647, %v590
        %vm646 = vcmp.eq.f32.partialorder %v645, 8.507059e+37
        %v647 = vand.u32 %v590, 2147483648
        %v648 = vor.u32 1.1754944e-38, %v647
        %v649 = vsel %vm646, %v648, %v644
        %v650 = vmul.f32 %v578, %v649
        %651 = vrot.lane.b32.xlu0 %v313, 64
        %v652 = vpop.permute.xlu0 %651
        %653 = vrot.lane.b32.xlu0 %v317, 64
        %v654 = vpop.permute.xlu0 %653
        %655 = vrot.lane.b32.xlu0 %v319, 64
        %v656 = vpop.permute.xlu0 %655
        %657 = vrot.lane.b32.xlu0 %v321, 64
        %v658 = vpop.permute.xlu0 %657
        %663 = vxpose.xlu0.b32.start [1/16] %v652, 128
        %664 = vxpose.xlu0.b32.cont [2/16] 0.0, 128
        %665 = vxpose.xlu0.b32.cont [3/16] 0.0, 128
        %666 = vxpose.xlu0.b32.cont [4/16] 0.0, 128
        %667 = vxpose.xlu0.b32.cont [5/16] 0.0, 128
        %668 = vxpose.xlu0.b32.cont [6/16] 0.0, 128
        %669 = vxpose.xlu0.b32.cont [7/16] 0.0, 128
        %670 = vxpose.xlu0.b32.cont [8/16] 0.0, 128
        %671 = vxpose.xlu0.b32.cont [9/16] 0.0, 128
        %672 = vxpose.xlu0.b32.cont [10/16] 0.0, 128
        %673 = vxpose.xlu0.b32.cont [11/16] 0.0, 128
        %674 = vxpose.xlu0.b32.cont [12/16] 0.0, 128
        %675 = vxpose.xlu0.b32.cont [13/16] 0.0, 128
        %676 = vxpose.xlu0.b32.cont [14/16] 0.0, 128
        %677 = vxpose.xlu0.b32.cont [15/16] 0.0, 128
        %678 = vxpose.xlu0.b32.end [16/16] 0.0, 128
        %v679 = vpop.trf.xlu0
        %v680 = vpop.trf.xlu0
        %v681 = vpop.trf.xlu0
        %v682 = vpop.trf.xlu0
        %v683 = vpop.trf.xlu0
        %v684 = vpop.trf.xlu0
        %v685 = vpop.trf.xlu0
        %v686 = vpop.trf.xlu0
        %v687 = vpop.trf.xlu0
        %v688 = vpop.trf.xlu0
        %v689 = vpop.trf.xlu0
        %v690 = vpop.trf.xlu0
        %v691 = vpop.trf.xlu0
        %v692 = vpop.trf.xlu0
        %v693 = vpop.trf.xlu0
        %v694 = vpop.trf.xlu0
        %695 = vxpose.xlu0.b32.start [1/16] %v654, 128
        %696 = vxpose.xlu0.b32.cont [2/16] 0.0, 128
        %697 = vxpose.xlu0.b32.cont [3/16] 0.0, 128
        %698 = vxpose.xlu0.b32.cont [4/16] 0.0, 128
        %699 = vxpose.xlu0.b32.cont [5/16] 0.0, 128
        %700 = vxpose.xlu0.b32.cont [6/16] 0.0, 128
        %701 = vxpose.xlu0.b32.cont [7/16] 0.0, 128
        %702 = vxpose.xlu0.b32.cont [8/16] 0.0, 128
        %703 = vxpose.xlu0.b32.cont [9/16] 0.0, 128
        %704 = vxpose.xlu0.b32.cont [10/16] 0.0, 128
        %705 = vxpose.xlu0.b32.cont [11/16] 0.0, 128
        %706 = vxpose.xlu0.b32.cont [12/16] 0.0, 128
        %707 = vxpose.xlu0.b32.cont [13/16] 0.0, 128
        %708 = vxpose.xlu0.b32.cont [14/16] 0.0, 128
        %709 = vxpose.xlu0.b32.cont [15/16] 0.0, 128
        %710 = vxpose.xlu0.b32.end [16/16] 0.0, 128
        %v711 = vpop.trf.xlu0
        %v712 = vpop.trf.xlu0
        %v713 = vpop.trf.xlu0
        %v714 = vpop.trf.xlu0
        %v715 = vpop.trf.xlu0
        %v716 = vpop.trf.xlu0
        %v717 = vpop.trf.xlu0
        %v718 = vpop.trf.xlu0
        %v719 = vpop.trf.xlu0
        %v720 = vpop.trf.xlu0
        %v721 = vpop.trf.xlu0
        %v722 = vpop.trf.xlu0
        %v723 = vpop.trf.xlu0
        %v724 = vpop.trf.xlu0
        %v725 = vpop.trf.xlu0
        %v726 = vpop.trf.xlu0
        %727 = vxpose.xlu0.b32.start [1/16] %v656, 128
        %728 = vxpose.xlu0.b32.cont [2/16] 0.0, 128
        %729 = vxpose.xlu0.b32.cont [3/16] 0.0, 128
        %730 = vxpose.xlu0.b32.cont [4/16] 0.0, 128
        %731 = vxpose.xlu0.b32.cont [5/16] 0.0, 128
        %732 = vxpose.xlu0.b32.cont [6/16] 0.0, 128
        %733 = vxpose.xlu0.b32.cont [7/16] 0.0, 128
        %734 = vxpose.xlu0.b32.cont [8/16] 0.0, 128
        %735 = vxpose.xlu0.b32.cont [9/16] 0.0, 128
        %736 = vxpose.xlu0.b32.cont [10/16] 0.0, 128
        %737 = vxpose.xlu0.b32.cont [11/16] 0.0, 128
        %738 = vxpose.xlu0.b32.cont [12/16] 0.0, 128
        %739 = vxpose.xlu0.b32.cont [13/16] 0.0, 128
        %740 = vxpose.xlu0.b32.cont [14/16] 0.0, 128
        %741 = vxpose.xlu0.b32.cont [15/16] 0.0, 128
        %742 = vxpose.xlu0.b32.end [16/16] 0.0, 128
        %v743 = vpop.trf.xlu0
        %v744 = vpop.trf.xlu0
        %v745 = vpop.trf.xlu0
        %v746 = vpop.trf.xlu0
        %v747 = vpop.trf.xlu0
        %v748 = vpop.trf.xlu0
        %v749 = vpop.trf.xlu0
        %v750 = vpop.trf.xlu0
        %v751 = vpop.trf.xlu0
        %v752 = vpop.trf.xlu0
        %v753 = vpop.trf.xlu0
        %v754 = vpop.trf.xlu0
        %v755 = vpop.trf.xlu0
        %v756 = vpop.trf.xlu0
        %v757 = vpop.trf.xlu0
        %v758 = vpop.trf.xlu0
        %759 = vxpose.xlu0.b32.start [1/16] %v658, 128
        %760 = vxpose.xlu0.b32.cont [2/16] 0.0, 128
        %761 = vxpose.xlu0.b32.cont [3/16] 0.0, 128
        %762 = vxpose.xlu0.b32.cont [4/16] 0.0, 128
        %763 = vxpose.xlu0.b32.cont [5/16] 0.0, 128
        %764 = vxpose.xlu0.b32.cont [6/16] 0.0, 128
        %765 = vxpose.xlu0.b32.cont [7/16] 0.0, 128
        %766 = vxpose.xlu0.b32.cont [8/16] 0.0, 128
        %767 = vxpose.xlu0.b32.cont [9/16] 0.0, 128
        %768 = vxpose.xlu0.b32.cont [10/16] 0.0, 128
        %769 = vxpose.xlu0.b32.cont [11/16] 0.0, 128
        %770 = vxpose.xlu0.b32.cont [12/16] 0.0, 128
        %771 = vxpose.xlu0.b32.cont [13/16] 0.0, 128
        %772 = vxpose.xlu0.b32.cont [14/16] 0.0, 128
        %773 = vxpose.xlu0.b32.cont [15/16] 0.0, 128
        %774 = vxpose.xlu0.b32.end [16/16] 0.0, 128
        %v775 = vpop.trf.xlu0
        %v776 = vpop.trf.xlu0
        %v777 = vpop.trf.xlu0
        %v778 = vpop.trf.xlu0
        %v779 = vpop.trf.xlu0
        %v780 = vpop.trf.xlu0
        %v781 = vpop.trf.xlu0
        %v782 = vpop.trf.xlu0
        %v783 = vpop.trf.xlu0
        %v784 = vpop.trf.xlu0
        %v785 = vpop.trf.xlu0
        %v786 = vpop.trf.xlu0
        %v787 = vpop.trf.xlu0
        %v788 = vpop.trf.xlu0
        %v789 = vpop.trf.xlu0
        %v790 = vpop.trf.xlu0
        %v792 = vsel %vm462, %v679, 0
        %v795 = vsel %vm462, %v605, 0
        %797 = vmatpush.xpose.msra.mxu0 0.0
        %798 = vmatpush.xpose.msra.mxu0 0.0
        %799 = vmatpush.xpose.msra.mxu0 0.0
        %800 = vmatpush.xpose.msra.mxu0 0.0
        %801 = vmatpush.xpose.msra.mxu0 0.0
        %802 = vmatpush.xpose.msra.mxu0 0.0
        %803 = vmatpush.xpose.msra.mxu0 0.0
        %804 = vmatpush.xpose.msra.mxu0 0.0
        %805 = vmatpush.xpose.msra.mxu0 0.0
        %806 = vmatpush.xpose.msra.mxu0 0.0
        %807 = vmatpush.xpose.msra.mxu0 0.0
        %808 = vmatpush.xpose.msra.mxu0 0.0
        %809 = vmatpush.xpose.msra.mxu0 0.0
        %810 = vmatpush.xpose.msra.mxu0 0.0
        %811 = vmatpush.xpose.msra.mxu0 0.0
        %812 = vmatpush.xpose.msra.mxu0 %v795
        %813 = vmatmul.f32.gmra.mxu0 %v792
        %v814 = vpop.f32.mrf.mxu0
        %v815 = vadd.f32 0.0, %v814
        %816 = vdwg.mxu0
        %v818 = vsel %vm462, %v711, 0
        %v821 = vsel %vm462, %v620, 0
        %823 = vmatpush.xpose.msra.mxu0 0.0
        %824 = vmatpush.xpose.msra.mxu0 0.0
        %825 = vmatpush.xpose.msra.mxu0 0.0
        %826 = vmatpush.xpose.msra.mxu0 0.0
        %827 = vmatpush.xpose.msra.mxu0 0.0
        %828 = vmatpush.xpose.msra.mxu0 0.0
        %829 = vmatpush.xpose.msra.mxu0 0.0
        %830 = vmatpush.xpose.msra.mxu0 0.0
        %831 = vmatpush.xpose.msra.mxu0 0.0
        %832 = vmatpush.xpose.msra.mxu0 0.0
        %833 = vmatpush.xpose.msra.mxu0 0.0
        %834 = vmatpush.xpose.msra.mxu0 0.0
        %835 = vmatpush.xpose.msra.mxu0 0.0
        %836 = vmatpush.xpose.msra.mxu0 0.0
        %837 = vmatpush.xpose.msra.mxu0 0.0
        %838 = vmatpush.xpose.msra.mxu0 %v821
        %839 = vmatmul.f32.gmra.mxu0 %v818
        %v840 = vpop.f32.mrf.mxu0
        %v841 = vadd.f32 0.0, %v840
        %842 = vdwg.mxu0
        %v844 = vsel %vm462, %v743, 0
        %v847 = vsel %vm462, %v635, 0
        %849 = vmatpush.xpose.msra.mxu0 0.0
        %850 = vmatpush.xpose.msra.mxu0 0.0
        %851 = vmatpush.xpose.msra.mxu0 0.0
        %852 = vmatpush.xpose.msra.mxu0 0.0
        %853 = vmatpush.xpose.msra.mxu0 0.0
        %854 = vmatpush.xpose.msra.mxu0 0.0
        %855 = vmatpush.xpose.msra.mxu0 0.0
        %856 = vmatpush.xpose.msra.mxu0 0.0
        %857 = vmatpush.xpose.msra.mxu0 0.0
        %858 = vmatpush.xpose.msra.mxu0 0.0
        %859 = vmatpush.xpose.msra.mxu0 0.0
        %860 = vmatpush.xpose.msra.mxu0 0.0
        %861 = vmatpush.xpose.msra.mxu0 0.0
        %862 = vmatpush.xpose.msra.mxu0 0.0
        %863 = vmatpush.xpose.msra.mxu0 0.0
        %864 = vmatpush.xpose.msra.mxu0 %v847
        %865 = vmatmul.f32.gmra.mxu0 %v844
        %v866 = vpop.f32.mrf.mxu0
        %v867 = vadd.f32 0.0, %v866
        %868 = vdwg.mxu0
        %v870 = vsel %vm462, %v775, 0
        %v873 = vsel %vm462, %v650, 0
        %875 = vmatpush.xpose.msra.mxu0 0.0
        %876 = vmatpush.xpose.msra.mxu0 0.0
        %877 = vmatpush.xpose.msra.mxu0 0.0
        %878 = vmatpush.xpose.msra.mxu0 0.0
        %879 = vmatpush.xpose.msra.mxu0 0.0
        %880 = vmatpush.xpose.msra.mxu0 0.0
        %881 = vmatpush.xpose.msra.mxu0 0.0
        %882 = vmatpush.xpose.msra.mxu0 0.0
        %883 = vmatpush.xpose.msra.mxu0 0.0
        %884 = vmatpush.xpose.msra.mxu0 0.0
        %885 = vmatpush.xpose.msra.mxu0 0.0
        %886 = vmatpush.xpose.msra.mxu0 0.0
        %887 = vmatpush.xpose.msra.mxu0 0.0
        %888 = vmatpush.xpose.msra.mxu0 0.0
        %889 = vmatpush.xpose.msra.mxu0 0.0
        %890 = vmatpush.xpose.msra.mxu0 %v873
        %891 = vmatmul.f32.gmra.mxu0 %v870
        %v892 = vpop.f32.mrf.mxu0
        %v893 = vadd.f32 0.0, %v892
        %894 = vdwg.mxu0
        %895 = vxpose.xlu0.b32.start [1/16] %v815, 128
        %896 = vxpose.xlu0.b32.cont [2/16] 0.0, 128
        %897 = vxpose.xlu0.b32.cont [3/16] 0.0, 128
        %898 = vxpose.xlu0.b32.cont [4/16] 0.0, 128
        %899 = vxpose.xlu0.b32.cont [5/16] 0.0, 128
        %900 = vxpose.xlu0.b32.cont [6/16] 0.0, 128
        %901 = vxpose.xlu0.b32.cont [7/16] 0.0, 128
        %902 = vxpose.xlu0.b32.cont [8/16] 0.0, 128
        %903 = vxpose.xlu0.b32.cont [9/16] 0.0, 128
        %904 = vxpose.xlu0.b32.cont [10/16] 0.0, 128
        %905 = vxpose.xlu0.b32.cont [11/16] 0.0, 128
        %906 = vxpose.xlu0.b32.cont [12/16] 0.0, 128
        %907 = vxpose.xlu0.b32.cont [13/16] 0.0, 128
        %908 = vxpose.xlu0.b32.cont [14/16] 0.0, 128
        %909 = vxpose.xlu0.b32.cont [15/16] 0.0, 128
        %910 = vxpose.xlu0.b32.end [16/16] 0.0, 128
        %v911 = vpop.trf.xlu0
        %v912 = vpop.trf.xlu0
        %v913 = vpop.trf.xlu0
        %v914 = vpop.trf.xlu0
        %v915 = vpop.trf.xlu0
        %v916 = vpop.trf.xlu0
        %v917 = vpop.trf.xlu0
        %v918 = vpop.trf.xlu0
        %v919 = vpop.trf.xlu0
        %v920 = vpop.trf.xlu0
        %v921 = vpop.trf.xlu0
        %v922 = vpop.trf.xlu0
        %v923 = vpop.trf.xlu0
        %v924 = vpop.trf.xlu0
        %v925 = vpop.trf.xlu0
        %v926 = vpop.trf.xlu0
        %927 = vxpose.xlu0.b32.start [1/16] %v841, 128
        %928 = vxpose.xlu0.b32.cont [2/16] 0.0, 128
        %929 = vxpose.xlu0.b32.cont [3/16] 0.0, 128
        %930 = vxpose.xlu0.b32.cont [4/16] 0.0, 128
        %931 = vxpose.xlu0.b32.cont [5/16] 0.0, 128
        %932 = vxpose.xlu0.b32.cont [6/16] 0.0, 128
        %933 = vxpose.xlu0.b32.cont [7/16] 0.0, 128
        %934 = vxpose.xlu0.b32.cont [8/16] 0.0, 128
        %935 = vxpose.xlu0.b32.cont [9/16] 0.0, 128
        %936 = vxpose.xlu0.b32.cont [10/16] 0.0, 128
        %937 = vxpose.xlu0.b32.cont [11/16] 0.0, 128
        %938 = vxpose.xlu0.b32.cont [12/16] 0.0, 128
        %939 = vxpose.xlu0.b32.cont [13/16] 0.0, 128
        %940 = vxpose.xlu0.b32.cont [14/16] 0.0, 128
        %941 = vxpose.xlu0.b32.cont [15/16] 0.0, 128
        %942 = vxpose.xlu0.b32.end [16/16] 0.0, 128
        %v943 = vpop.trf.xlu0
        %v944 = vpop.trf.xlu0
        %v945 = vpop.trf.xlu0
        %v946 = vpop.trf.xlu0
        %v947 = vpop.trf.xlu0
        %v948 = vpop.trf.xlu0
        %v949 = vpop.trf.xlu0
        %v950 = vpop.trf.xlu0
        %v951 = vpop.trf.xlu0
        %v952 = vpop.trf.xlu0
        %v953 = vpop.trf.xlu0
        %v954 = vpop.trf.xlu0
        %v955 = vpop.trf.xlu0
        %v956 = vpop.trf.xlu0
        %v957 = vpop.trf.xlu0
        %v958 = vpop.trf.xlu0
        %959 = vxpose.xlu0.b32.start [1/16] %v867, 128
        %960 = vxpose.xlu0.b32.cont [2/16] 0.0, 128
        %961 = vxpose.xlu0.b32.cont [3/16] 0.0, 128
        %962 = vxpose.xlu0.b32.cont [4/16] 0.0, 128
        %963 = vxpose.xlu0.b32.cont [5/16] 0.0, 128
        %964 = vxpose.xlu0.b32.cont [6/16] 0.0, 128
        %965 = vxpose.xlu0.b32.cont [7/16] 0.0, 128
        %966 = vxpose.xlu0.b32.cont [8/16] 0.0, 128
        %967 = vxpose.xlu0.b32.cont [9/16] 0.0, 128
        %968 = vxpose.xlu0.b32.cont [10/16] 0.0, 128
        %969 = vxpose.xlu0.b32.cont [11/16] 0.0, 128
        %970 = vxpose.xlu0.b32.cont [12/16] 0.0, 128
        %971 = vxpose.xlu0.b32.cont [13/16] 0.0, 128
        %972 = vxpose.xlu0.b32.cont [14/16] 0.0, 128
        %973 = vxpose.xlu0.b32.cont [15/16] 0.0, 128
        %974 = vxpose.xlu0.b32.end [16/16] 0.0, 128
        %v975 = vpop.trf.xlu0
        %v976 = vpop.trf.xlu0
        %v977 = vpop.trf.xlu0
        %v978 = vpop.trf.xlu0
        %v979 = vpop.trf.xlu0
        %v980 = vpop.trf.xlu0
        %v981 = vpop.trf.xlu0
        %v982 = vpop.trf.xlu0
        %v983 = vpop.trf.xlu0
        %v984 = vpop.trf.xlu0
        %v985 = vpop.trf.xlu0
        %v986 = vpop.trf.xlu0
        %v987 = vpop.trf.xlu0
        %v988 = vpop.trf.xlu0
        %v989 = vpop.trf.xlu0
        %v990 = vpop.trf.xlu0
        %991 = vxpose.xlu0.b32.start [1/16] %v893, 128
        %992 = vxpose.xlu0.b32.cont [2/16] 0.0, 128
        %993 = vxpose.xlu0.b32.cont [3/16] 0.0, 128
        %994 = vxpose.xlu0.b32.cont [4/16] 0.0, 128
        %995 = vxpose.xlu0.b32.cont [5/16] 0.0, 128
        %996 = vxpose.xlu0.b32.cont [6/16] 0.0, 128
        %997 = vxpose.xlu0.b32.cont [7/16] 0.0, 128
        %998 = vxpose.xlu0.b32.cont [8/16] 0.0, 128
        %999 = vxpose.xlu0.b32.cont [9/16] 0.0, 128
        %1000 = vxpose.xlu0.b32.cont [10/16] 0.0, 128
        %1001 = vxpose.xlu0.b32.cont [11/16] 0.0, 128
        %1002 = vxpose.xlu0.b32.cont [12/16] 0.0, 128
        %1003 = vxpose.xlu0.b32.cont [13/16] 0.0, 128
        %1004 = vxpose.xlu0.b32.cont [14/16] 0.0, 128
        %1005 = vxpose.xlu0.b32.cont [15/16] 0.0, 128
        %1006 = vxpose.xlu0.b32.end [16/16] 0.0, 128
        %v1007 = vpop.trf.xlu0
        %v1008 = vpop.trf.xlu0
        %v1009 = vpop.trf.xlu0
        %v1010 = vpop.trf.xlu0
        %v1011 = vpop.trf.xlu0
        %v1012 = vpop.trf.xlu0
        %v1013 = vpop.trf.xlu0
        %v1014 = vpop.trf.xlu0
        %v1015 = vpop.trf.xlu0
        %v1016 = vpop.trf.xlu0
        %v1017 = vpop.trf.xlu0
        %v1018 = vpop.trf.xlu0
        %v1019 = vpop.trf.xlu0
        %v1020 = vpop.trf.xlu0
        %v1021 = vpop.trf.xlu0
        %v1022 = vpop.trf.xlu0
        %v1023 = vrot.slane %v975, 4
        %vm1024 = vcmask 1047556
        %v1025 = vsel %vm1024, %v1023, %v911
        %v1026 = vrot.slane %v911, 4
        %v1027 = vsel %vm1024, %v975, %v1026
        %v1029 = vunpack.c.l.s4 1983009808
        %v1030 = vunpack.c.0.s8 %v1029
        %v1031 = vperm.slane %v1025, %v1030
        %v1033 = vunpack.c.l.s4 1983009808
        %v1034 = vunpack.c.0.s8 %v1033
        %v1035 = vperm.slane %v1027, %v1034
        %v1036 = vrot.slane %v1007, 4
        %v1037 = vsel %vm1024, %v1036, %v943
        %v1038 = vrot.slane %v943, 4
        %v1039 = vsel %vm1024, %v1007, %v1038
        %v1041 = vunpack.c.l.s4 1983009808
        %v1042 = vunpack.c.0.s8 %v1041
        %v1043 = vperm.slane %v1037, %v1042
        %v1045 = vunpack.c.l.s4 1983009808
        %v1046 = vunpack.c.0.s8 %v1045
        %v1047 = vperm.slane %v1039, %v1046
        %v1048 = vrot.slane %v1043, 4
        %v1049 = vsel %vm1024, %v1048, %v1031
        %v1050 = vrot.slane %v1031, 4
        %v1051 = vsel %vm1024, %v1043, %v1050
        %v1053 = vunpack.c.l.s4 1934713408
        %v1054 = vunpack.c.0.s8 %v1053
        %v1055 = vperm.slane %v1049, %v1054
        %v1057 = vunpack.c.l.s4 1934713408
        %v1058 = vunpack.c.0.s8 %v1057
        %v1059 = vperm.slane %v1051, %v1058
        %v1060 = vrot.slane %v1047, 4
        %v1061 = vsel %vm1024, %v1060, %v1035
        %v1062 = vrot.slane %v1035, 4
        %v1063 = vsel %vm1024, %v1047, %v1062
        %v1065 = vunpack.c.l.s4 1934713408
        %v1066 = vunpack.c.0.s8 %v1065
        %v1067 = vperm.slane %v1061, %v1066
        %v1069 = vunpack.c.l.s4 1934713408
        %v1070 = vunpack.c.0.s8 %v1069
        %v1071 = vperm.slane %v1063, %v1070
        %v1072 = vrot.slane %v1055, 4
        %v1073 = vsel %vm1024, 0.0, %v1072
        %v1074 = vrot.slane %v1059, 4
        %v1075 = vsel %vm1024, 0.0, %v1074
        %v1076 = vrot.slane %v1067, 4
        %v1077 = vsel %vm1024, 0.0, %v1076
        %v1078 = vrot.slane %v1071, 4
        %v1079 = vsel %vm1024, 0.0, %v1078
        %v1080 = vsel %vm1024, %v1074, %v1055
        %v1082 = vunpack.c.l.s4 1983009808
        %v1083 = vunpack.c.0.s8 %v1082
        %v1084 = vperm.slane %v1080, %v1083
        %v1085 = vrot.slane %v1075, 4
        %v1086 = vsel %vm1024, %v1085, %v1073
        %v1088 = vunpack.c.l.s4 1983009808
        %v1089 = vunpack.c.0.s8 %v1088
        %v1090 = vperm.slane %v1086, %v1089
        %v1091 = vsel %vm1024, %v1078, %v1067
        %v1093 = vunpack.c.l.s4 1983009808
        %v1094 = vunpack.c.0.s8 %v1093
        %v1095 = vperm.slane %v1091, %v1094
        %v1096 = vrot.slane %v1079, 4
        %v1097 = vsel %vm1024, %v1096, %v1077
        %v1099 = vunpack.c.l.s4 1983009808
        %v1100 = vunpack.c.0.s8 %v1099
        %v1101 = vperm.slane %v1097, %v1100
        %v1102 = vrot.slane %v1090, 4
        %v1103 = vsel %vm1024, %v1102, %v1084
        %v1104 = vrot.slane %v1084, 4
        %v1105 = vsel %vm1024, %v1090, %v1104
        %v1107 = vunpack.c.l.s4 1934713408
        %v1108 = vunpack.c.0.s8 %v1107
        %v1109 = vperm.slane %v1103, %v1108
        %v1111 = vunpack.c.l.s4 1934713408
        %v1112 = vunpack.c.0.s8 %v1111
        %v1113 = vperm.slane %v1105, %v1112
        %v1114 = vrot.slane %v1101, 4
        %v1115 = vsel %vm1024, %v1114, %v1095
        %v1116 = vrot.slane %v1095, 4
        %v1117 = vsel %vm1024, %v1101, %v1116
        %v1119 = vunpack.c.l.s4 1934713408
        %v1120 = vunpack.c.0.s8 %v1119
        %v1121 = vperm.slane %v1115, %v1120
        %v1123 = vunpack.c.l.s4 1934713408
        %v1124 = vunpack.c.0.s8 %v1123
        %v1125 = vperm.slane %v1117, %v1124
        %v1126 = vrot.slane %v1121, 4
        %v1127 = vsel %vm1024, %v1126, %v1109
        %v1128 = vrot.slane %v1109, 4
        %v1129 = vsel %vm1024, %v1121, %v1128
        %v1130 = vrot.slane %v1125, 4
        %v1131 = vsel %vm1024, %v1130, %v1113
        %v1132 = vrot.slane %v1113, 4
        %v1133 = vsel %vm1024, %v1125, %v1132
        %1135 = vrot.lane.b32.xlu0 %v1129, 8
        %v1136 = vpop.permute.xlu0 %1135
        %1139 = vrot.lane.b32.xlu0 %v1131, 16
        %v1140 = vpop.permute.xlu0 %1139
        %1143 = vrot.lane.b32.xlu0 %v1133, 24
        %v1144 = vpop.permute.xlu0 %1143
        %v1146 = vsel %vm462, %v1127, %v1136
        %vm1147 = vcmask 130048
        %v1148 = vsel %vm1147, %v1146, %v1140
        %vm1149 = vcmask 195584
        %v1150 = vsel %vm1149, %v1148, %v1144
        %v1151 = vld [vmem:[%s2] sm:$0xff]
        %v1152 = vld [vmem:[%s2 + $0x8] sm:$0xff]
        %v1153 = vld [vmem:[%s2 + $0x10] sm:$0xff]
        %v1154 = vld [vmem:[%s2 + $0x18] sm:$0xff]
        %v1155 = vperm.slane %v285, 2
        %v1157 = vsel %vm291, %v1150, 0
        %1159 = vmatpush.msra.mxu0 0.0
        %1160 = vmatpush.msra.mxu0 0.0
        %1161 = vmatpush.msra.mxu0 0.0
        %1162 = vmatpush.msra.mxu0 0.0
        %1163 = vmatpush.msra.mxu0 0.0
        %1164 = vmatpush.msra.mxu0 0.0
        %1165 = vmatpush.msra.mxu0 0.0
        %1166 = vmatpush.msra.mxu0 0.0
        %1167 = vmatpush.msra.mxu0 0.0
        %1168 = vmatpush.msra.mxu0 0.0
        %1169 = vmatpush.msra.mxu0 0.0
        %1170 = vmatpush.msra.mxu0 0.0
        %1171 = vmatpush.msra.mxu0 %v1154
        %1172 = vmatpush.msra.mxu0 %v1153
        %1173 = vmatpush.msra.mxu0 %v1152
        %1174 = vmatpush.msra.mxu0 %v1151
        %1175 = vmatmul.f32.gmra.mxu0 %v1157
        %v1176 = vpop.f32.mrf.mxu0
        %v1177 = vadd.f32 %v1155, %v1176
        %1178 = vdwg.mxu0
        %v1179 = vadd.f32 %v284, %v1177
        %v1180 = vsel %vm291, %v1179, 0.0
        %1181 = vadd.xlane.f32.xlu0 %v1180
        %v1182 = vpop.xlane.xlu0 %1181
        %v1183 = vrcp.pop 32.0
        %v1184 = vmul.f32 32.0, %v1183
        %v1185 = vsub.f32 1.0, %v1184
        %v1186 = vmul.f32 %v1183, %v1185
        %v1187 = vadd.f32 %v1183, %v1186
        %vm1188 = vweird.f32 %v1183
        %v1189 = vsel %vm1188, %v1183, %v1187
        %v1190 = vmul.f32 %v1182, %v1189
        %v1191 = vsub.f32 %v1179, %v1190
        %v1192 = vmul.f32 %v1191, %v1191
        %v1193 = vsel %vm291, %v1192, 0.0
        %1194 = vadd.xlane.f32.xlu0 %v1193
        %v1195 = vpop.xlane.xlu0 %1194
        %v1196 = vmul.f32 %v1195, %v1189
        %v1197 = vadd.f32 %v1196, 1e-05
        %v1198 = vrsqrt.pop %v1197
        %v1199 = vmul.f32 %v1198, %v1197
        %v1200 = vmul.f32 %v1199, %v1198
        %v1201 = vmul.f32 0.5, %v1200
        %v1202 = vsub.f32 1.5, %v1201
        %v1203 = vmul.f32 %v1198, %v1202
        %vm1204 = vweird.f32 %v1197
        %vm1205 = vweird.f32 %v1198
        %vm1206 = vmor %vm1204, %vm1205
        %v1207 = vsel %vm1206, %v1198, %v1203
        %v1208 = vmul.f32 %v1191, %v1207
        %v1209 = vperm.slane %v285, 4
        %v1210 = vmul.f32 %v1208, %v1209
        %v1211 = vperm.slane %v285, 5
        %v1212 = vadd.f32 %v1210, %v1211
        %v1213 = vld [vmem:[%s3] sm:$0xff]
        %v1214 = vld [vmem:[%s3 + $0x8] sm:$0xff]
        %v1215 = vld [vmem:[%s3 + $0x10] sm:$0xff]
        %v1216 = vld [vmem:[%s3 + $0x18] sm:$0xff]
        %v1217 = vperm.slane %v285, 1
        %v1219 = vsel %vm291, %v1212, 0
        %1221 = vmatpush.msra.mxu0 0.0
        %1222 = vmatpush.msra.mxu0 0.0
        %1223 = vmatpush.msra.mxu0 0.0
        %1224 = vmatpush.msra.mxu0 0.0
        %1225 = vmatpush.msra.mxu0 0.0
        %1226 = vmatpush.msra.mxu0 0.0
        %1227 = vmatpush.msra.mxu0 0.0
        %1228 = vmatpush.msra.mxu0 0.0
        %1229 = vmatpush.msra.mxu0 0.0
        %1230 = vmatpush.msra.mxu0 0.0
        %1231 = vmatpush.msra.mxu0 0.0
        %1232 = vmatpush.msra.mxu0 0.0
        %1233 = vmatpush.msra.mxu0 %v1216
        %1234 = vmatpush.msra.mxu0 %v1215
        %1235 = vmatpush.msra.mxu0 %v1214
        %1236 = vmatpush.msra.mxu0 %v1213
        %1237 = vmatmul.f32.gmra.mxu0 %v1219
        %v1238 = vpop.f32.mrf.mxu0
        %v1239 = vadd.f32 %v1217, %v1238
        %1240 = vdwg.mxu0
        %v1241 = vmax.f32 %v1239, 0.0
        %v1242 = vld [vmem:[%s4] sm:$0xff]
        %v1243 = vld [vmem:[%s4 + $0x8] sm:$0xff]
        %v1244 = vld [vmem:[%s4 + $0x10] sm:$0xff]
        %v1245 = vld [vmem:[%s4 + $0x18] sm:$0xff]
        %v1246 = vld [vmem:[%s4 + $0x20] sm:$0xff]
        %v1247 = vld [vmem:[%s4 + $0x28] sm:$0xff]
        %v1248 = vld [vmem:[%s4 + $0x30] sm:$0xff]
        %v1249 = vld [vmem:[%s4 + $0x38] sm:$0xff]
        %v1250 = vperm.slane %v285, 3
        %vm1251 = vcmask 523264
        %v1253 = vsel %vm1251, %v1241, 0
        %1255 = vmatpush.msra.mxu0 0.0
        %1256 = vmatpush.msra.mxu0 0.0
        %1257 = vmatpush.msra.mxu0 0.0
        %1258 = vmatpush.msra.mxu0 0.0
        %1259 = vmatpush.msra.mxu0 0.0
        %1260 = vmatpush.msra.mxu0 0.0
        %1261 = vmatpush.msra.mxu0 0.0
        %1262 = vmatpush.msra.mxu0 0.0
        %1263 = vmatpush.msra.mxu0 %v1249
        %1264 = vmatpush.msra.mxu0 %v1248
        %1265 = vmatpush.msra.mxu0 %v1247
        %1266 = vmatpush.msra.mxu0 %v1246
        %1267 = vmatpush.msra.mxu0 %v1245
        %1268 = vmatpush.msra.mxu0 %v1244
        %1269 = vmatpush.msra.mxu0 %v1243
        %1270 = vmatpush.msra.mxu0 %v1242
        %1271 = vmatmul.f32.gmra.mxu0 %v1253
        %v1272 = vpop.f32.mrf.mxu0
        %v1273 = vadd.f32 %v1250, %v1272
        %1274 = vdwg.mxu0
        %v1275 = vadd.f32 %v1212, %v1273
        %v1276 = vsel %vm291, %v1275, 0.0
        %1277 = vadd.xlane.f32.xlu0 %v1276
        %v1278 = vpop.xlane.xlu0 %1277
        %v1279 = vmul.f32 %v1278, %v1189
        %v1280 = vsub.f32 %v1275, %v1279
        %v1281 = vmul.f32 %v1280, %v1280
        %v1282 = vsel %vm291, %v1281, 0.0
        %1283 = vadd.xlane.f32.xlu0 %v1282
        %v1284 = vpop.xlane.xlu0 %1283
        %v1285 = vmul.f32 %v1284, %v1189
        %v1286 = vadd.f32 %v1285, 1e-05
        %v1287 = vrsqrt.pop %v1286
        %v1288 = vmul.f32 %v1287, %v1286
        %v1289 = vmul.f32 %v1288, %v1287
        %v1290 = vmul.f32 0.5, %v1289
        %v1291 = vsub.f32 1.5, %v1290
        %v1292 = vmul.f32 %v1287, %v1291
        %vm1293 = vweird.f32 %v1286
        %vm1294 = vweird.f32 %v1287
        %vm1295 = vmor %vm1293, %vm1294
        %v1296 = vsel %vm1295, %v1287, %v1292
        %v1297 = vmul.f32 %v1280, %v1296
        %v1298 = vperm.slane %v285, 6
        %v1299 = vmul.f32 %v1297, %v1298
        %v1300 = vperm.slane %v285, 7
        %v1301 = vadd.f32 %v1299, %v1300
        %1302 = vst.msk [vmem:[%s283] sm:$0xff] %vm291, %v1301
        %s1303 = sand.u32 %s163, 1
        %s1304 = scalar_lea.sflag [#allocation4], %s1303
        %s1305 = sand.u32 %s163, 1
        %s1306 = smul.addr %s1305, 8
        %s1307 = scalar_lea.vmem [#allocation7], %s1306
        // Predicated region
        $region53: #{tpu_custom_call.1} parent=43 // pred_check
          %p1308 = pneg %p173
        $region54: #{tpu_custom_call.1} parent=43 // pred_check_branch
          %1310 = sbr.rel (%p1308) target = $region56
        $region55: #{tpu_custom_call.1} parent=43 // pred_region
          %1312 = vsyncadd %s1304, 0
          %s1313 = smul.addr %s24, 8
          %s1314 = scalar_lea.hbm %s6, %s1313
          %s1316 = sshll.u32 %s1307, 4
          %s1317 = int_to_ptr.vmem [resolvable:$true] %s1316
          %s1318 = sshll.u32 %s1314, 4
          %s1319 = int_to_ptr.hbm [resolvable:$true] %s1318
          %1321 = dma.vmem_to_hbm [thread:$0]  %s1317, 128, %s1319, %s1304
        $region56: #{tpu_custom_call.1} parent=43 // pred_fallthru
          _
      $region44: #{tpu_custom_call.1} parent=5 // pred_fallthru
        _
      %p1322 = scmp.le.s32.totalorder 2, %s19
      // Predicated region
      $region57: #{tpu_custom_call.1} parent=5 // pred_check
        %p1323 = pneg %p1322
      $region58: #{tpu_custom_call.1} parent=5 // pred_check_branch
        %1325 = sbr.rel (%p1323) target = $region60
      $region59: #{tpu_custom_call.1} parent=5 // pred_region
        %s1326 = ssub.s32 %s19, 2
        // Predicated region
        $region61: #{tpu_custom_call.1} parent=59 // pred_check
          %p1327 = pneg %p179
        $region62: #{tpu_custom_call.1} parent=59 // pred_check_branch
          %1329 = sbr.rel (%p1327) target = $region64
        $region63: #{tpu_custom_call.1} parent=59 // pred_region
          %s1330 = sand.u32 %s164, 1
          %s1331 = scalar_lea.sflag [#allocation4], %s1330
          %s1332 = sand.u32 %s164, 1
          %s1333 = smul.addr %s1332, 8
          %s1334 = scalar_lea.vmem [#allocation7], %s1333
          %1336 = dma.done %s1331, 128
        $region64: #{tpu_custom_call.1} parent=59 // pred_fallthru
          _
      $region60: #{tpu_custom_call.1} parent=5 // pred_fallthru
        _
    $region6: #{tpu_custom_call.1} parent=1 // loop_footer
      %s23 = sadd.s32 1, %s19
    $region7: #{tpu_custom_call.1} parent=1 // loop_footer_branch
      %18 = sbr.rel target = $region3
    $region8: #{tpu_custom_call.1} parent=1 // loop_exit
      _
    %1337 = vsyncpa [#allocation3], 1
    %s1338 = scalar_lea.sflag [#allocation3], 1
    %1339 = vsyncpa %s1338, 1
    %1340 = vsyncpa [#allocation6], 1
    %1341 = vsyncpa [#allocation4], 1
    %s1342 = scalar_lea.sflag [#allocation4], 1
    %1343 = vsyncpa %s1342, 1

</llo_original>
